<compile_context>
chip_gen: v6e
topology: v6e:2x2x1
jax: 0.10.0
libtpu: 0.0.40
codegen_flags: <defaults>
</compile_context>

<pallas_src>
import functools
import math

import jax
import jax.numpy as jnp
from jax.experimental import pallas as pl
from jax.experimental.pallas import tpu as pltpu


def autopad(k, p=None):
    if p is None:
        p = k // 2 if isinstance(k, int) else [x // 2 for x in k]
    return p


def _patch(x, kh, kw, tile_ho, wo, stride):
    # x: (tile_hi, Wp, Cin) -> the (tile_ho, wo, Cin) window for tap (kh, kw).
    if stride == 1:
        return x[kh:kh + tile_ho, kw:kw + wo, :]
    return x[kh:kh + (tile_ho - 1) * stride + 1:stride,
             kw:kw + (wo - 1) * stride + 1:stride, :]


def _conv_kernel_fold(x_ref, w_ref, bias_ref, o_ref, *, k, stride):
    # im2col path (small Cin): single MXU contraction of depth k*k*Cin.
    # x_ref:    (1, tile_hi, Wp, Cin)      bf16
    # w_ref:    (k*k*Cin, tile_co)         bf16 (BN scale folded in)
    # bias_ref: (1, tile_co)               f32
    # o_ref:    (1, tile_ho, Wo, tile_co)  bf16
    tile_ho, wo, tile_co = o_ref.shape[1], o_ref.shape[2], o_ref.shape[3]
    cin = x_ref.shape[3]
    m = tile_ho * wo

    x = x_ref[0]
    patches = [_patch(x, kh, kw, tile_ho, wo, stride)
               for kh in range(k) for kw in range(k)]
    p = patches[0] if len(patches) == 1 else jnp.concatenate(patches, axis=-1)

    acc = jnp.dot(p.reshape(m, k * k * cin), w_ref[...],
                  preferred_element_type=jnp.float32)           # f32 in vregs

    y = acc + bias_ref[...]                                      # folded BN bias
    y = y * pl.reciprocal(1.0 + jnp.exp(-y), approx=True)        # SiLU (EUP slot)
    o_ref[0] = y.reshape(tile_ho, wo, tile_co).astype(o_ref.dtype)


def _conv_kernel_taps(x_ref, w_ref, bias_ref, o_ref, *, k, stride):
    # Per-tap path (large Cin >= 256): k*k matmuls, accumulate in registers.
    # w_ref: (k, k, Cin, tile_co)
    tile_ho, wo, tile_co = o_ref.shape[1], o_ref.shape[2], o_ref.shape[3]
    cin = x_ref.shape[3]
    m = tile_ho * wo

    x = x_ref[0]
    acc = None
    for kh in range(k):
        for kw in range(k):
            patch = _patch(x, kh, kw, tile_ho, wo, stride).reshape(m, cin)
            c = jnp.dot(patch, w_ref[kh, kw], preferred_element_type=jnp.float32)
            acc = c if acc is None else acc + c

    y = acc + bias_ref[...]
    y = y * pl.reciprocal(1.0 + jnp.exp(-y), approx=True)
    o_ref[0] = y.reshape(tile_ho, wo, tile_co).astype(o_ref.dtype)


def conv_bn_silu_nhwc(x_nhwc, w_oihw, gamma, beta, run_mean, run_var,
                      *, k=3, s=1, p=None, eps=1e-5, tile_co=None,
                      vmem_budget_bytes=36 * 2**20):
    """Eval-mode Conv+BN+SiLU on NHWC input; returns NHWC bf16."""
    p = autopad(k, p)
    N, H, W, C1 = x_nhwc.shape
    C2 = w_oihw.shape[0]

    Hp, Wp = H + 2 * p, W + 2 * p
    Ho = (Hp - k) // s + 1
    Wo = (Wp - k) // s + 1

    if tile_co is None:
        # 128 matches the v5e MXU N-dim; 256 matches v6e/v7x. Pass 128 on v5e.
        tile_co = 128 if C2 <= 128 else 256
    co_pad = math.ceil(C2 / tile_co) * tile_co

    # Fold all k*k taps into the contraction when Cin is small (<=128): the
    # MXU wants >=256-deep contractions; deep Cin contracts fine per tap.
    fold_taps = (k == 1) or (C1 <= 128)

    # ---- tile_ho from an explicit per-step VMEM budget (safe on v7x 64 MiB) ----
    def vmem_est(tho):
        thi = (tho - 1) * s + k
        xb = thi * Wp * C1 * 2                       # bf16 input tile
        wb = k * k * C1 * tile_co * 2                # bf16 weight slab
        bb = tile_co * 4
        ob = tho * Wo * tile_co * 2                  # bf16 output tile
        inter = tho * Wo * ((k * k * C1 if fold_taps else C1) * 2 + 2 * tile_co * 4)
        return 2 * (xb + wb + bb + ob) + inter       # x2 for double buffering

    tile_ho = Ho
    while tile_ho > 8 and vmem_est(tile_ho) > vmem_budget_bytes:
        tile_ho = -(-tile_ho // 2)
    tile_ho = min(tile_ho, Ho)
    n_h = math.ceil(Ho / tile_ho)
    tile_hi = (tile_ho - 1) * s + k

    # ---- glue (plain JAX): BN folding, layout, padding, bf16 casts ----
    scale = (gamma / jnp.sqrt(run_var + eps)).astype(jnp.float32)
    bias = (beta - run_mean * scale).astype(jnp.float32)

    w_hwio = jnp.transpose(w_oihw, (2, 3, 1, 0)).astype(jnp.float32)  # OIHW->HWIO
    w_folded = w_hwio * scale[None, None, None, :]                    # fold BN scale
    w_folded = jnp.pad(w_folded, ((0, 0), (0, 0), (0, 0), (0, co_pad - C2)))
    w_folded = w_folded.astype(jnp.bfloat16)                          # (k,k,C1,co_pad)
    w_kernel = w_folded.reshape(k * k * C1, co_pad) if fold_taps else w_folded

    bias_p = jnp.pad(bias, (0, co_pad - C2)).reshape(1, co_pad)       # f32

    extra = max(0, (n_h * tile_ho - 1) * s + k - Hp)                  # cover last tile
    x_pad = jnp.pad(x_nhwc.astype(jnp.bfloat16),
                    ((0, 0), (p, p + extra), (p, p), (0, 0)))

    if n_h == 1:
        x_tiles = x_pad                                               # no halo duplication
    else:
        # TODO(synk): avoid materializing halo'd tiles (element-indexed blocks
        # or manual DMA windows) -- duplicates ~(k-s)/tile_ho of the input rows.
        x_tiles = jnp.stack(
            [x_pad[:, h * tile_ho * s: h * tile_ho * s + tile_hi] for h in range(n_h)],
            axis=1).reshape(N * n_h, tile_hi, Wp, C1)

    # ---- grid order: keep the larger operand resident across the inner loop ----
    B_ax = N * n_h
    CO_ax = co_pad // tile_co
    w_bytes = k * k * C1 * co_pad * 2
    x_bytes = B_ax * tile_hi * Wp * C1 * 2
    b_outer = (B_ax * w_bytes) <= (CO_ax * x_bytes)   # cost of re-streaming weights vs x

    if fold_taps:
        w_block = (k * k * C1, tile_co)
        w_idx = lambda co: (0, co)
    else:
        w_block = (k, k, C1, tile_co)
        w_idx = lambda co: (0, 0, 0, co)

    if b_outer:
        grid = (B_ax, CO_ax)
        x_map = lambda b, co: (b, 0, 0, 0)
        w_map = lambda b, co: w_idx(co)
        bias_map = lambda b, co: (0, co)
        o_map = lambda b, co: (b, 0, 0, co)
    else:
        grid = (CO_ax, B_ax)
        x_map = lambda co, b: (b, 0, 0, 0)
        w_map = lambda co, b: w_idx(co)
        bias_map = lambda co, b: (0, co)
        o_map = lambda co, b: (b, 0, 0, co)

    kernel = functools.partial(
        _conv_kernel_fold if fold_taps else _conv_kernel_taps, k=k, stride=s)

    flops = 2 * N * Ho * Wo * k * k * C1 * C2
    bytes_accessed = (int(x_tiles.size) * 2 + int(w_kernel.size) * 2
                      + int(bias_p.size) * 4 + B_ax * tile_ho * Wo * co_pad * 2)
    vmem_limit = int(min(max(vmem_est(tile_ho) + 4 * 2**20, 32 * 2**20), 48 * 2**20))

    out = pl.pallas_call(
        kernel,
        out_shape=jax.ShapeDtypeStruct((B_ax, tile_ho, Wo, co_pad), jnp.bfloat16),
        grid_spec=pltpu.PrefetchScalarGridSpec(
            num_scalar_prefetch=0,
            grid=grid,
            in_specs=[
                pl.BlockSpec((1, tile_hi, Wp, C1), x_map),
                pl.BlockSpec(w_block, w_map),
                pl.BlockSpec((1, tile_co), bias_map),
            ],
            out_specs=pl.BlockSpec((1, tile_ho, Wo, tile_co), o_map),
        ),
        compiler_params=pltpu.CompilerParams(
            dimension_semantics=("parallel", "parallel"),
            vmem_limit_bytes=vmem_limit),
        cost_estimate=pl.CostEstimate(
            flops=flops,
            transcendentals=N * Ho * Wo * C2,
            bytes_accessed=bytes_accessed),
    )(x_tiles, w_kernel, bias_p)

    out = out.reshape(N, n_h * tile_ho, Wo, co_pad)[:, :Ho, :, :C2]
    return out                                                        # NHWC, bf16


def conv_bn_silu(x_nchw, w_oihw, gamma, beta, run_mean, run_var,
                 *, k=3, s=1, p=None, eps=1e-5, tile_co=None):
    """Equivalent of Conv.forward (eval-mode BN + SiLU) on NCHW input.

    NOTE: the NCHW<->NHWC transposes here exist only for PyTorch parity; a
    full model should keep activations NHWC and call conv_bn_silu_nhwc.
    """
    x_nhwc = jnp.transpose(x_nchw, (0, 2, 3, 1))
    y = conv_bn_silu_nhwc(x_nhwc, w_oihw, gamma, beta, run_mean, run_var,
                          k=k, s=s, p=p, eps=eps, tile_co=tile_co)
    return jnp.transpose(y, (0, 3, 1, 2)).astype(x_nchw.dtype)


def _reference(x_nchw, w_oihw, gamma, beta, run_mean, run_var,
               *, k=3, s=1, p=None, eps=1e-5):
    p = autopad(k, p)
    y = jax.lax.conv_general_dilated(
        x_nchw.astype(jnp.float32), w_oihw.astype(jnp.float32),
        window_strides=(s, s), padding=[(p, p), (p, p)],
        dimension_numbers=("NCHW", "OIHW", "NCHW"))
    scale = gamma / jnp.sqrt(run_var + eps)
    bias = beta - run_mean * scale
    y = y * scale[None, :, None, None] + bias[None, :, None, None]
    return y * jax.nn.sigmoid(y)


if __name__ == "__main__":
    # Small shapes: batch=2, c1=4, c2=8, H=W=16, k=3, s=1 (autopad -> p=1).
    N, C1, C2, H, W, K, S = 2, 4, 8, 16, 16, 3, 1

    key = jax.random.PRNGKey(0)
    kx, kw, kg, kb, km, kv = jax.random.split(key, 6)

    x = jax.random.normal(kx, (N, C1, H, W), jnp.float32)
    w = jax.random.normal(kw, (C2, C1, K, K), jnp.float32) * 0.1   # Conv2d weight (OIHW), bias=False
    gamma = 1.0 + 0.1 * jax.random.normal(kg, (C2,), jnp.float32)  # BatchNorm2d weight
    beta = 0.1 * jax.random.normal(kb, (C2,), jnp.float32)         # BatchNorm2d bias
    run_mean = 0.1 * jax.random.normal(km, (C2,), jnp.float32)     # running_mean
    run_var = jnp.abs(1.0 + 0.1 * jax.random.normal(kv, (C2,), jnp.float32))  # running_var

    out = conv_bn_silu(x, w, gamma, beta, run_mean, run_var, k=K, s=S)
    out = jax.block_until_ready(out)

    ref = _reference(x, w, gamma, beta, run_mean, run_var, k=K, s=S)
    assert out.shape == (N, C2, H, W)
    # bf16 MXU inputs / bf16 output (f32 accumulation) + approx-reciprocal
    # sigmoid -> looser tolerance (inference-grade).
    assert jnp.allclose(out, ref, atol=5e-2, rtol=5e-2), "mismatch vs reference"

    print("KERNEL_OK")
</pallas_src>

<mosaic_0001>
module attributes {stable_mosaic.version = 11 : i64} {
  func.func @_conv_kernel_fold(%arg0: i32, %arg1: i32, %arg2: memref<1x18x18x4xbf16, #tpu.memory_space<vmem>>, %arg3: memref<36x128xbf16, #tpu.memory_space<vmem>>, %arg4: memref<1x128xf32, #tpu.memory_space<vmem>>, %arg5: memref<1x16x16x128xbf16, #tpu.memory_space<vmem>>) attributes {dimension_semantics = [#tpu.dimension_semantics<parallel>, #tpu.dimension_semantics<parallel>], iteration_bounds = array<i64: 1, 2>, scalar_prefetch = 0 : i64, scratch_operands = 0 : i64, tpu.core_type = #tpu.core_type<tc>, window_params = [{transform_indices = @transform_0, window_bounds = array<i64: 1, 18, 18, 4>}, {transform_indices = @transform_1, window_bounds = array<i64: 36, 128>}, {transform_indices = @transform_2, window_bounds = array<i64: 1, 128>}, {transform_indices = @transform_3, window_bounds = array<i64: 1, 16, 16, 128>}]} {
    %c0 = arith.constant 0 : index
    %c0_0 = arith.constant 0 : index
    %c0_1 = arith.constant 0 : index
    %c0_2 = arith.constant 0 : index
    %0 = vector.load %arg2[%c0, %c0_0, %c0_1, %c0_2] : memref<1x18x18x4xbf16, #tpu.memory_space<vmem>>, vector<1x18x18x4xbf16>
    %1 = vector.shape_cast %0 : vector<1x18x18x4xbf16> to vector<18x18x4xbf16>
    %2 = vector.extract_strided_slice %1 {offsets = [0, 0, 0], sizes = [16, 16, 4], strides = [1, 1, 1]} : vector<18x18x4xbf16> to vector<16x16x4xbf16>
    %3 = vector.extract_strided_slice %1 {offsets = [0, 1, 0], sizes = [16, 16, 4], strides = [1, 1, 1]} : vector<18x18x4xbf16> to vector<16x16x4xbf16>
    %4 = vector.extract_strided_slice %1 {offsets = [0, 2, 0], sizes = [16, 16, 4], strides = [1, 1, 1]} : vector<18x18x4xbf16> to vector<16x16x4xbf16>
    %5 = vector.extract_strided_slice %1 {offsets = [1, 0, 0], sizes = [16, 16, 4], strides = [1, 1, 1]} : vector<18x18x4xbf16> to vector<16x16x4xbf16>
    %6 = vector.extract_strided_slice %1 {offsets = [1, 1, 0], sizes = [16, 16, 4], strides = [1, 1, 1]} : vector<18x18x4xbf16> to vector<16x16x4xbf16>
    %7 = vector.extract_strided_slice %1 {offsets = [1, 2, 0], sizes = [16, 16, 4], strides = [1, 1, 1]} : vector<18x18x4xbf16> to vector<16x16x4xbf16>
    %8 = vector.extract_strided_slice %1 {offsets = [2, 0, 0], sizes = [16, 16, 4], strides = [1, 1, 1]} : vector<18x18x4xbf16> to vector<16x16x4xbf16>
    %9 = vector.extract_strided_slice %1 {offsets = [2, 1, 0], sizes = [16, 16, 4], strides = [1, 1, 1]} : vector<18x18x4xbf16> to vector<16x16x4xbf16>
    %10 = vector.extract_strided_slice %1 {offsets = [2, 2, 0], sizes = [16, 16, 4], strides = [1, 1, 1]} : vector<18x18x4xbf16> to vector<16x16x4xbf16>
    %11 = tpu.concatenate %2, %3, %4, %5, %6, %7, %8, %9, %10 in 2 : vector<16x16x4xbf16>, vector<16x16x4xbf16>, vector<16x16x4xbf16>, vector<16x16x4xbf16>, vector<16x16x4xbf16>, vector<16x16x4xbf16>, vector<16x16x4xbf16>, vector<16x16x4xbf16>, vector<16x16x4xbf16> -> vector<16x16x36xbf16>
    %12 = vector.shape_cast %11 : vector<16x16x36xbf16> to vector<256x36xbf16>
    %c0_3 = arith.constant 0 : index
    %c0_4 = arith.constant 0 : index
    %13 = vector.load %arg3[%c0_3, %c0_4] : memref<36x128xbf16, #tpu.memory_space<vmem>>, vector<36x128xbf16>
    %cst = arith.constant dense<0.000000e+00> : vector<256x128xf32>
    %14 = tpu.matmul %12, %13, %cst {dimension_numbers = #tpu.dot_dimension_numbers<[1], [0], [0], [1], [0, 0, 1, 1], [], []>} : vector<256x36xbf16>, vector<36x128xbf16>, vector<256x128xf32> -> vector<256x128xf32>
    %c0_5 = arith.constant 0 : index
    %c0_6 = arith.constant 0 : index
    %15 = vector.load %arg4[%c0_5, %c0_6] : memref<1x128xf32, #tpu.memory_space<vmem>>, vector<1x128xf32>
    %16 = vector.broadcast %15 : vector<1x128xf32> to vector<256x128xf32>
    %17 = arith.addf %14, %16 : vector<256x128xf32>
    %cst_7 = arith.constant 0.000000e+00 : f32
    %18 = vector.broadcast %cst_7 : f32 to vector<256x128xf32>
    %19 = arith.subf %18, %17 : vector<256x128xf32>
    %20 = math.exp %19 : vector<256x128xf32>
    %cst_8 = arith.constant 1.000000e+00 : f32
    %21 = vector.broadcast %cst_8 : f32 to vector<256x128xf32>
    %22 = arith.addf %21, %20 : vector<256x128xf32>
    %23 = tpu.reciprocal %22 {approx = true} : vector<256x128xf32> -> vector<256x128xf32>
    %24 = arith.mulf %17, %23 : vector<256x128xf32>
    %25 = vector.shape_cast %24 : vector<256x128xf32> to vector<16x16x128xf32>
    %26 = arith.truncf %25 : vector<16x16x128xf32> to vector<16x16x128xbf16>
    %c0_9 = arith.constant 0 : index
    %c0_10 = arith.constant 0 : index
    %c0_11 = arith.constant 0 : index
    %c0_12 = arith.constant 0 : index
    %27 = vector.load %arg5[%c0_9, %c0_10, %c0_11, %c0_12] : memref<1x16x16x128xbf16, #tpu.memory_space<vmem>>, vector<1x16x16x128xbf16>
    %28 = vector.shape_cast %27 : vector<1x16x16x128xbf16> to vector<16x16x128xbf16>
    %29 = vector.shape_cast %26 : vector<16x16x128xbf16> to vector<1x16x16x128xbf16>
    tpu.vector_store %arg5[%c0_9, %c0_10, %c0_11, %c0_12], %29 {strides = array<i32>} : memref<1x16x16x128xbf16, #tpu.memory_space<vmem>>, vector<1x16x16x128xbf16>,
    return
  }
  func.func @transform_0(%arg0: i32, %arg1: i32) -> (i32, i32, i32, i32) {
    %c0_i32 = arith.constant 0 : i32
    %c0_i32_0 = arith.constant 0 : i32
    %c0_i32_1 = arith.constant 0 : i32
    %c0_i32_2 = arith.constant 0 : i32
    return %arg1, %c0_i32, %c0_i32_0, %c0_i32_1 : i32, i32, i32, i32
  }
  func.func @transform_1(%arg0: i32, %arg1: i32) -> (i32, i32) {
    %c0_i32 = arith.constant 0 : i32
    %c0_i32_0 = arith.constant 0 : i32
    return %c0_i32, %arg0 : i32, i32
  }
  func.func @transform_2(%arg0: i32, %arg1: i32) -> (i32, i32) {
    %c0_i32 = arith.constant 0 : i32
    %c0_i32_0 = arith.constant 0 : i32
    return %c0_i32, %arg0 : i32, i32
  }
  func.func @transform_3(%arg0: i32, %arg1: i32) -> (i32, i32, i32, i32) {
    %c0_i32 = arith.constant 0 : i32
    %c0_i32_0 = arith.constant 0 : i32
    %c0_i32_1 = arith.constant 0 : i32
    return %arg1, %c0_i32, %c0_i32_0, %arg0 : i32, i32, i32, i32
  }
}

</mosaic_0001>

<llo_original>
// kernel: tpu_custom_call.1
$region0: #{tpu_custom_call.1}
  #allocation0 [shape = 'u32[]', space=smem, size = 0x4, offset = 0x4, fixed_abs, tag = 'smem constant byte address 0x4 - core index']
  #allocation1 [shape = 'u32[144,128]{1,0:T(1,128)}', space=vmem, size = 0x12000, scoped, tag = 'internal scratch']
  %s0 = inlined_call_operand.vmem [shape: bf16[2,18,18,4], index: 0, kind: input, shape index: {}]
  %s1 = inlined_call_operand.vmem [shape: bf16[36,128], index: 1, kind: input, shape index: {}]
  %s2 = inlined_call_operand.vmem [shape: f32[1,128], index: 2, kind: input, shape index: {}]
  %s3 = inlined_call_operand.hbm [shape: bf16[2,16,16,128], index: 3, kind: output, shape index: {}]
  %s4 = sld [smem:[#allocation0]]
  $region45: #{tpu_custom_call.1} parent=0
    _
  %s6 = ssub.s32 1, %s4
  %s7 = scalar_select 0, %s6, %s4
  $region1: #{tpu_custom_call.1} parent=0
    #allocation2 [shape = 'u8[131072]{0}', space=vmem, size = 0x20000, scoped, tag = 'output window, operand 0']
    #allocation3 [shape = 's32[2]{0}', space=sflag, size = 0x8, scoped, tag = 'scoped memory for tpu_custom_call.1']
    %8 = vsyncpa [#allocation3], 0
    %s9 = scalar_lea.sflag [#allocation3], 1
    %10 = vsyncpa %s9, 0
    loop: start=0, step=1, limit=4
    $region2: #{tpu_custom_call.1} parent=1 // loop_pre_header
      _
    $region3: #{tpu_custom_call.1} parent=1 // loop_header
      %s12 = sphi 0, %s16
      %p13 = scmp.ge.s32.totalorder %s12, 4
      %s19 = sphi 0, %s31
      %s20 = sphi 0, %s27
      %s21 = sphi 0, %s19
      %s22 = sphi 0, %s20
      %s23 = sphi 0, %s21
      %s24 = sphi 0, %s22
      %s34 = sphi 0, %s36
      %s37 = sphi 0, %s34
      %s38 = sphi 0, %s37
      %s54 = sphi 0, %s38
      %s60 = sphi 0, %s62
      %s63 = sphi 0, %s60
      %s64 = sphi 0, %s63
      %s80 = sphi 0, %s64
      %s86 = sphi 0, %s88
      %s89 = sphi 0, %s86
      %s90 = sphi 0, %s89
      %s106 = sphi 0, %s90
      %s114 = sphi 0, %s116
      %s117 = sphi 0, %s114
      %s118 = sphi 0, %s117
      %s134 = sphi 0, %s118
    $region4: #{tpu_custom_call.1} parent=1 // loop_header_branch
      %15 = sbr.rel (%p13) target = $region8
    $region5: #{tpu_custom_call.1} parent=1 // loop_body
      %s17 = ssub.s32 %s12, 1
      %s18 = ssub.s32 %s12, 2
      %s25 = sadd.s32 1, %s20
      %p26 = scmp.ge.s32.totalorder %s25, 2
      %s27 = scalar_select %p26, 0, %s25
      %s28 = sadd.s32 1, %s19
      %s29 = scalar_select %p26, %s28, %s19
      %p30 = scmp.ge.s32.totalorder %s29, 1
      %s31 = scalar_select %p30, 0, %s29
      %s32 = ssub.s32 %s20, %s27
      %p33 = scmp.eq.s32.totalorder %s32, 0
      %s35 = sadd.s32 %s34, 1
      %s36 = scalar_select %p33, %s34, %s35
      %p39 = pneg %p33
      %p40 = scmp.eq.s32.totalorder %s12, 1
      %p41 = por %p39, %p40
      %p42 = scmp.ne.s32.totalorder %s34, %s37
      %p43 = scmp.eq.s32.totalorder %s12, 0
      %p44 = por %p42, %p43
      %p45 = scmp.ne.s32.totalorder %s34, %s37
      %p46 = scmp.eq.s32.totalorder %s17, 1
      %p47 = por %p45, %p46
      %p48 = scmp.ne.s32.totalorder %s37, %s38
      %p49 = scmp.eq.s32.totalorder %s17, 0
      %p50 = por %p48, %p49
      %p51 = scmp.ne.s32.totalorder %s37, %s38
      %p52 = scmp.eq.s32.totalorder %s18, 1
      %p53 = por %p51, %p52
      %p55 = scmp.ne.s32.totalorder %s38, %s54
      %p56 = scmp.eq.s32.totalorder %s18, 0
      %p57 = por %p55, %p56
      %s58 = ssub.s32 %s19, %s31
      %p59 = scmp.eq.s32.totalorder %s58, 0
      %s61 = sadd.s32 %s60, 1
      %s62 = scalar_select %p59, %s60, %s61
      %p65 = pneg %p59
      %p66 = scmp.eq.s32.totalorder %s12, 1
      %p67 = por %p65, %p66
      %p68 = scmp.ne.s32.totalorder %s60, %s63
      %p69 = scmp.eq.s32.totalorder %s12, 0
      %p70 = por %p68, %p69
      %p71 = scmp.ne.s32.totalorder %s60, %s63
      %p72 = scmp.eq.s32.totalorder %s17, 1
      %p73 = por %p71, %p72
      %p74 = scmp.ne.s32.totalorder %s63, %s64
      %p75 = scmp.eq.s32.totalorder %s17, 0
      %p76 = por %p74, %p75
      %p77 = scmp.ne.s32.totalorder %s63, %s64
      %p78 = scmp.eq.s32.totalorder %s18, 1
      %p79 = por %p77, %p78
      %p81 = scmp.ne.s32.totalorder %s64, %s80
      %p82 = scmp.eq.s32.totalorder %s18, 0
      %p83 = por %p81, %p82
      %s84 = ssub.s32 %s19, %s31
      %p85 = scmp.eq.s32.totalorder %s84, 0
      %s87 = sadd.s32 %s86, 1
      %s88 = scalar_select %p85, %s86, %s87
      %p91 = pneg %p85
      %p92 = scmp.eq.s32.totalorder %s12, 1
      %p93 = por %p91, %p92
      %p94 = scmp.ne.s32.totalorder %s86, %s89
      %p95 = scmp.eq.s32.totalorder %s12, 0
      %p96 = por %p94, %p95
      %p97 = scmp.ne.s32.totalorder %s86, %s89
      %p98 = scmp.eq.s32.totalorder %s17, 1
      %p99 = por %p97, %p98
      %p100 = scmp.ne.s32.totalorder %s89, %s90
      %p101 = scmp.eq.s32.totalorder %s17, 0
      %p102 = por %p100, %p101
      %p103 = scmp.ne.s32.totalorder %s89, %s90
      %p104 = scmp.eq.s32.totalorder %s18, 1
      %p105 = por %p103, %p104
      %p107 = scmp.ne.s32.totalorder %s90, %s106
      %p108 = scmp.eq.s32.totalorder %s18, 0
      %p109 = por %p107, %p108
      %s110 = ssub.s32 %s20, %s27
      %s111 = ssub.s32 %s19, %s31
      %s112 = sor.u32 %s110, %s111
      %p113 = scmp.eq.s32.totalorder %s112, 0
      %s115 = sadd.s32 %s114, 1
      %s116 = scalar_select %p113, %s114, %s115
      %p119 = pneg %p113
      %p120 = scmp.eq.s32.totalorder %s12, 1
      %p121 = por %p119, %p120
      %p122 = scmp.ne.s32.totalorder %s114, %s117
      %p123 = scmp.eq.s32.totalorder %s12, 0
      %p124 = por %p122, %p123
      %p125 = scmp.ne.s32.totalorder %s114, %s117
      %p126 = scmp.eq.s32.totalorder %s17, 1
      %p127 = por %p125, %p126
      %p128 = scmp.ne.s32.totalorder %s117, %s118
      %p129 = scmp.eq.s32.totalorder %s17, 0
      %p130 = por %p128, %p129
      %p131 = scmp.ne.s32.totalorder %s117, %s118
      %p132 = scmp.eq.s32.totalorder %s18, 1
      %p133 = por %p131, %p132
      %p135 = scmp.ne.s32.totalorder %s118, %s134
      %p136 = scmp.eq.s32.totalorder %s18, 0
      %p137 = por %p135, %p136
      %p138 = scmp.le.s32.totalorder 1, %s12
      %p139 = scmp.lt.s32.totalorder %s12, 3
      %p140 = pnand %p138, %p139
      %p141 = pneg %p140
      // Predicated region
      $region9: #{tpu_custom_call.1} parent=5 // pred_check
        _
      $region10: #{tpu_custom_call.1} parent=5 // pred_check_branch
        %143 = sbr.rel (%p140) target = $region12
      $region11: #{tpu_custom_call.1} parent=5 // pred_region
        %s144 = ssub.s32 %s12, 1
        // Predicated region
        $region13: #{tpu_custom_call.1} parent=11 // pred_check
          %p145 = pneg %p76
        $region14: #{tpu_custom_call.1} parent=11 // pred_check_branch
          %147 = sbr.rel (%p145) target = $region16
        $region15: #{tpu_custom_call.1} parent=11 // pred_region
          %p148 = scmp.lt.s32.totalorder %s21, 0
          %s149 = scalar_select %p148, %s21, 0
          %s150 = smul.addr %s149, 4
          %s151 = scalar_lea.vmem %s1, %s150
        $region16: #{tpu_custom_call.1} parent=11 // pred_fallthru
          _
        // Predicated region
        $region17: #{tpu_custom_call.1} parent=11 // pred_check
          %p152 = pneg %p102
        $region18: #{tpu_custom_call.1} parent=11 // pred_check_branch
          %154 = sbr.rel (%p152) target = $region20
        $region19: #{tpu_custom_call.1} parent=11 // pred_region
          %p155 = scmp.lt.s32.totalorder %s21, 0
          %s156 = scalar_select %p155, %s21, 0
          %s157 = scalar_lea.vmem %s2, %s156
        $region20: #{tpu_custom_call.1} parent=11 // pred_fallthru
          _
      $region12: #{tpu_custom_call.1} parent=5 // pred_fallthru
        _
      %p158 = scmp.lt.s32.totalorder %s12, 2
      // Predicated region
      $region21: #{tpu_custom_call.1} parent=5 // pred_check
        %p159 = pneg %p158
      $region22: #{tpu_custom_call.1} parent=5 // pred_check_branch
        %161 = sbr.rel (%p159) target = $region24
      $region23: #{tpu_custom_call.1} parent=5 // pred_region
        // Predicated region
        $region25: #{tpu_custom_call.1} parent=23 // pred_check
          %p162 = pneg %p44
        $region26: #{tpu_custom_call.1} parent=23 // pred_check_branch
          %164 = sbr.rel (%p162) target = $region28
        $region27: #{tpu_custom_call.1} parent=23 // pred_region
          %p165 = scmp.lt.s32.totalorder %s20, 1
          %s166 = scalar_select %p165, %s20, 1
          %s167 = smul.addr %s166, 54
          %s168 = smul.addr %s167, 4
          %s169 = scalar_lea.vmem %s0, %s168
        $region28: #{tpu_custom_call.1} parent=23 // pred_fallthru
          _
      $region24: #{tpu_custom_call.1} parent=5 // pred_fallthru
        _
      %p170 = scmp.le.s32.totalorder 1, %s12
      %p171 = scmp.lt.s32.totalorder %s12, 3
      %p172 = pnand %p170, %p171
      %p173 = pneg %p172
      // Predicated region
      $region29: #{tpu_custom_call.1} parent=5 // pred_check
        _
      $region30: #{tpu_custom_call.1} parent=5 // pred_check_branch
        %175 = sbr.rel (%p172) target = $region32
      $region31: #{tpu_custom_call.1} parent=5 // pred_region
        %s176 = ssub.s32 %s12, 1
        %p177 = scmp.lt.s32.totalorder %s22, 1
        %s178 = scalar_select %p177, %s22, 1
        %s179 = smul.addr %s178, 54
        %s180 = smul.addr %s179, 4
        %s181 = scalar_lea.vmem %s0, %s180
        %p182 = pneg %p50
        %p183 = pneg %p47
        %p184 = scmp.lt.s32.totalorder %s21, 0
        %s185 = scalar_select %p184, %s21, 0
        %s186 = smul.addr %s185, 4
        %s187 = scalar_lea.vmem %s1, %s186
        %p188 = pneg %p76
        %p189 = pneg %p73
        %p190 = scmp.lt.s32.totalorder %s21, 0
        %s191 = scalar_select %p190, %s21, 0
        %s192 = scalar_lea.vmem %s2, %s191
        %p193 = pneg %p102
        %p194 = pneg %p99
        %p195 = pneg %p130
        %p196 = pneg %p127
        %s197 = sand.u32 %s117, 1
        %s198 = scalar_lea.sflag [#allocation3], %s197
        %s199 = sand.u32 %s117, 1
        %s200 = smul.addr %s199, 128
        %s201 = scalar_lea.vmem [#allocation2], %s200
        %p202 = scmp.lt.s32.totalorder %s22, 1
        %s203 = scalar_select %p202, %s22, 1
        %s204 = smul.addr %s203, 54
        %s205 = smul.addr %s204, 4
        %s206 = scalar_lea.vmem %s0, %s205
        %p207 = scmp.lt.s32.totalorder %s21, 0
        %s208 = scalar_select %p207, %s21, 0
        %s209 = smul.addr %s208, 4
        %s210 = scalar_lea.vmem %s1, %s209
        %p211 = scmp.lt.s32.totalorder %s21, 0
        %s212 = scalar_select %p211, %s21, 0
        %s213 = scalar_lea.vmem %s2, %s212
        %v215 = vld [vmem:[%s206] sm:$0xf]
        %v216 = vld [vmem:[%s206 + $0x4] sm:$0xf]
        %v217 = vld [vmem:[%s206 + $0x8] sm:$0x1]
        %v218 = vld [vmem:[%s206 + $0xc] sm:$0xf]
        %v219 = vld [vmem:[%s206 + $0x10] sm:$0xf]
        %v220 = vld [vmem:[%s206 + $0x14] sm:$0x1]
        %v221 = vld [vmem:[%s206 + $0x18] sm:$0xf]
        %v222 = vld [vmem:[%s206 + $0x1c] sm:$0xf]
        %v223 = vld [vmem:[%s206 + $0x20] sm:$0x1]
        %v224 = vld [vmem:[%s206 + $0x24] sm:$0xf]
        %v225 = vld [vmem:[%s206 + $0x28] sm:$0xf]
        %v226 = vld [vmem:[%s206 + $0x2c] sm:$0x1]
        %v227 = vld [vmem:[%s206 + $0x30] sm:$0xf]
        %v228 = vld [vmem:[%s206 + $0x34] sm:$0xf]
        %v229 = vld [vmem:[%s206 + $0x38] sm:$0x1]
        %v230 = vld [vmem:[%s206 + $0x3c] sm:$0xf]
        %v231 = vld [vmem:[%s206 + $0x40] sm:$0xf]
        %v232 = vld [vmem:[%s206 + $0x44] sm:$0x1]
        %v233 = vld [vmem:[%s206 + $0x48] sm:$0xf]
        %v234 = vld [vmem:[%s206 + $0x4c] sm:$0xf]
        %v235 = vld [vmem:[%s206 + $0x50] sm:$0x1]
        %v236 = vld [vmem:[%s206 + $0x54] sm:$0xf]
        %v237 = vld [vmem:[%s206 + $0x58] sm:$0xf]
        %v238 = vld [vmem:[%s206 + $0x5c] sm:$0x1]
        %v239 = vld [vmem:[%s206 + $0x60] sm:$0xf]
        %v240 = vld [vmem:[%s206 + $0x64] sm:$0xf]
        %v241 = vld [vmem:[%s206 + $0x68] sm:$0x1]
        %v242 = vld [vmem:[%s206 + $0x6c] sm:$0xf]
        %v243 = vld [vmem:[%s206 + $0x70] sm:$0xf]
        %v244 = vld [vmem:[%s206 + $0x74] sm:$0x1]
        %v245 = vld [vmem:[%s206 + $0x78] sm:$0xf]
        %v246 = vld [vmem:[%s206 + $0x7c] sm:$0xf]
        %v247 = vld [vmem:[%s206 + $0x80] sm:$0x1]
        %v248 = vld [vmem:[%s206 + $0x84] sm:$0xf]
        %v249 = vld [vmem:[%s206 + $0x88] sm:$0xf]
        %v250 = vld [vmem:[%s206 + $0x8c] sm:$0x1]
        %v251 = vld [vmem:[%s206 + $0x90] sm:$0xf]
        %v252 = vld [vmem:[%s206 + $0x94] sm:$0xf]
        %v253 = vld [vmem:[%s206 + $0x98] sm:$0x1]
        %v254 = vld [vmem:[%s206 + $0x9c] sm:$0xf]
        %v255 = vld [vmem:[%s206 + $0xa0] sm:$0xf]
        %v256 = vld [vmem:[%s206 + $0xa4] sm:$0x1]
        %v257 = vld [vmem:[%s206 + $0xa8] sm:$0xf]
        %v258 = vld [vmem:[%s206 + $0xac] sm:$0xf]
        %v259 = vld [vmem:[%s206 + $0xb0] sm:$0x1]
        %v260 = vld [vmem:[%s206 + $0xb4] sm:$0xf]
        %v261 = vld [vmem:[%s206 + $0xb8] sm:$0xf]
        %v262 = vld [vmem:[%s206 + $0xbc] sm:$0x1]
        %v263 = vld [vmem:[%s206 + $0xc0] sm:$0xf]
        %v264 = vld [vmem:[%s206 + $0xc4] sm:$0xf]
        %v265 = vld [vmem:[%s206 + $0xc8] sm:$0x1]
        %v266 = vld [vmem:[%s206 + $0xcc] sm:$0xf]
        %v267 = vld [vmem:[%s206 + $0xd0] sm:$0xf]
        %v268 = vld [vmem:[%s206 + $0xd4] sm:$0x1]
        %v301 = vunpack.c.l.b16 %v215
        %v302 = vunpack.c.l.b16 %v216
        %v303 = vunpack.c.l.b16 %v218
        %v304 = vunpack.c.l.b16 %v219
        %v305 = vunpack.c.l.b16 %v221
        %v306 = vunpack.c.l.b16 %v222
        %v307 = vunpack.c.l.b16 %v224
        %v308 = vunpack.c.l.b16 %v225
        %v309 = vunpack.c.l.b16 %v227
        %v310 = vunpack.c.l.b16 %v228
        %v311 = vunpack.c.l.b16 %v230
        %v312 = vunpack.c.l.b16 %v231
        %v313 = vunpack.c.l.b16 %v233
        %v314 = vunpack.c.l.b16 %v234
        %v315 = vunpack.c.l.b16 %v236
        %v316 = vunpack.c.l.b16 %v237
        %v317 = vunpack.c.l.b16 %v239
        %v318 = vunpack.c.l.b16 %v240
        %v319 = vunpack.c.l.b16 %v242
        %v320 = vunpack.c.l.b16 %v243
        %v321 = vunpack.c.l.b16 %v245
        %v322 = vunpack.c.l.b16 %v246
        %v323 = vunpack.c.l.b16 %v248
        %v324 = vunpack.c.l.b16 %v249
        %v325 = vunpack.c.l.b16 %v251
        %v326 = vunpack.c.l.b16 %v252
        %v327 = vunpack.c.l.b16 %v254
        %v328 = vunpack.c.l.b16 %v255
        %v329 = vunpack.c.l.b16 %v257
        %v330 = vunpack.c.l.b16 %v258
        %v331 = vunpack.c.l.b16 %v260
        %v332 = vunpack.c.l.b16 %v261
        %v333 = vpack.c.b16 %v302, %v301
        %v334 = vpack.c.b16 %v304, %v303
        %v335 = vpack.c.b16 %v306, %v305
        %v336 = vpack.c.b16 %v308, %v307
        %v337 = vpack.c.b16 %v310, %v309
        %v338 = vpack.c.b16 %v312, %v311
        %v339 = vpack.c.b16 %v314, %v313
        %v340 = vpack.c.b16 %v316, %v315
        %v341 = vpack.c.b16 %v318, %v317
        %v342 = vpack.c.b16 %v320, %v319
        %v343 = vpack.c.b16 %v322, %v321
        %v344 = vpack.c.b16 %v324, %v323
        %v345 = vpack.c.b16 %v326, %v325
        %v346 = vpack.c.b16 %v328, %v327
        %v347 = vpack.c.b16 %v330, %v329
        %v348 = vpack.c.b16 %v332, %v331
        %v365 = vunpack.c.l.b16 %v217
        %v366 = vunpack.c.l.b16 %v220
        %v367 = vunpack.c.l.b16 %v223
        %v368 = vunpack.c.l.b16 %v226
        %v369 = vunpack.c.l.b16 %v229
        %v370 = vunpack.c.l.b16 %v232
        %v371 = vunpack.c.l.b16 %v235
        %v372 = vunpack.c.l.b16 %v238
        %v373 = vunpack.c.l.b16 %v241
        %v374 = vunpack.c.l.b16 %v244
        %v375 = vunpack.c.l.b16 %v247
        %v376 = vunpack.c.l.b16 %v250
        %v377 = vunpack.c.l.b16 %v253
        %v378 = vunpack.c.l.b16 %v256
        %v379 = vunpack.c.l.b16 %v259
        %v380 = vunpack.c.l.b16 %v262
        %v381 = vpack.c.b16 %v365, %v365
        %v382 = vpack.c.b16 %v366, %v366
        %v383 = vpack.c.b16 %v367, %v367
        %v384 = vpack.c.b16 %v368, %v368
        %v385 = vpack.c.b16 %v369, %v369
        %v386 = vpack.c.b16 %v370, %v370
        %v387 = vpack.c.b16 %v371, %v371
        %v388 = vpack.c.b16 %v372, %v372
        %v389 = vpack.c.b16 %v373, %v373
        %v390 = vpack.c.b16 %v374, %v374
        %v391 = vpack.c.b16 %v375, %v375
        %v392 = vpack.c.b16 %v376, %v376
        %v393 = vpack.c.b16 %v377, %v377
        %v394 = vpack.c.b16 %v378, %v378
        %v395 = vpack.c.b16 %v379, %v379
        %v396 = vpack.c.b16 %v380, %v380
        %vm397 = vsmask.f32 7424
        %v399 = vshrl.u32 %v333, 16
        %v401 = vshll.u32 %v333, 16
        %v403 = vrot.slane %v401, 1
        %v404 = vor.u32 %v399, %v403
        %v406 = vshll.u32 %v381, 16
        %v408 = vrot.slane %v406, 1
        %v409 = vsel %vm397, %v404, %v408
        %v411 = vshrl.u32 %v334, 16
        %v413 = vshll.u32 %v334, 16
        %v415 = vrot.slane %v413, 1
        %v416 = vor.u32 %v411, %v415
        %v418 = vshll.u32 %v382, 16
        %v420 = vrot.slane %v418, 1
        %v421 = vsel %vm397, %v416, %v420
        %v423 = vshrl.u32 %v335, 16
        %v425 = vshll.u32 %v335, 16
        %v427 = vrot.slane %v425, 1
        %v428 = vor.u32 %v423, %v427
        %v430 = vshll.u32 %v383, 16
        %v432 = vrot.slane %v430, 1
        %v433 = vsel %vm397, %v428, %v432
        %v435 = vshrl.u32 %v336, 16
        %v437 = vshll.u32 %v336, 16
        %v439 = vrot.slane %v437, 1
        %v440 = vor.u32 %v435, %v439
        %v442 = vshll.u32 %v384, 16
        %v444 = vrot.slane %v442, 1
        %v445 = vsel %vm397, %v440, %v444
        %v447 = vshrl.u32 %v337, 16
        %v449 = vshll.u32 %v337, 16
        %v451 = vrot.slane %v449, 1
        %v452 = vor.u32 %v447, %v451
        %v454 = vshll.u32 %v385, 16
        %v456 = vrot.slane %v454, 1
        %v457 = vsel %vm397, %v452, %v456
        %v459 = vshrl.u32 %v338, 16
        %v461 = vshll.u32 %v338, 16
        %v463 = vrot.slane %v461, 1
        %v464 = vor.u32 %v459, %v463
        %v466 = vshll.u32 %v386, 16
        %v468 = vrot.slane %v466, 1
        %v469 = vsel %vm397, %v464, %v468
        %v471 = vshrl.u32 %v339, 16
        %v473 = vshll.u32 %v339, 16
        %v475 = vrot.slane %v473, 1
        %v476 = vor.u32 %v471, %v475
        %v478 = vshll.u32 %v387, 16
        %v480 = vrot.slane %v478, 1
        %v481 = vsel %vm397, %v476, %v480
        %v483 = vshrl.u32 %v340, 16
        %v485 = vshll.u32 %v340, 16
        %v487 = vrot.slane %v485, 1
        %v488 = vor.u32 %v483, %v487
        %v490 = vshll.u32 %v388, 16
        %v492 = vrot.slane %v490, 1
        %v493 = vsel %vm397, %v488, %v492
        %v495 = vshrl.u32 %v341, 16
        %v497 = vshll.u32 %v341, 16
        %v499 = vrot.slane %v497, 1
        %v500 = vor.u32 %v495, %v499
        %v502 = vshll.u32 %v389, 16
        %v504 = vrot.slane %v502, 1
        %v505 = vsel %vm397, %v500, %v504
        %v507 = vshrl.u32 %v342, 16
        %v509 = vshll.u32 %v342, 16
        %v511 = vrot.slane %v509, 1
        %v512 = vor.u32 %v507, %v511
        %v514 = vshll.u32 %v390, 16
        %v516 = vrot.slane %v514, 1
        %v517 = vsel %vm397, %v512, %v516
        %v519 = vshrl.u32 %v343, 16
        %v521 = vshll.u32 %v343, 16
        %v523 = vrot.slane %v521, 1
        %v524 = vor.u32 %v519, %v523
        %v526 = vshll.u32 %v391, 16
        %v528 = vrot.slane %v526, 1
        %v529 = vsel %vm397, %v524, %v528
        %v531 = vshrl.u32 %v344, 16
        %v533 = vshll.u32 %v344, 16
        %v535 = vrot.slane %v533, 1
        %v536 = vor.u32 %v531, %v535
        %v538 = vshll.u32 %v392, 16
        %v540 = vrot.slane %v538, 1
        %v541 = vsel %vm397, %v536, %v540
        %v543 = vshrl.u32 %v345, 16
        %v545 = vshll.u32 %v345, 16
        %v547 = vrot.slane %v545, 1
        %v548 = vor.u32 %v543, %v547
        %v550 = vshll.u32 %v393, 16
        %v552 = vrot.slane %v550, 1
        %v553 = vsel %vm397, %v548, %v552
        %v555 = vshrl.u32 %v346, 16
        %v557 = vshll.u32 %v346, 16
        %v559 = vrot.slane %v557, 1
        %v560 = vor.u32 %v555, %v559
        %v562 = vshll.u32 %v394, 16
        %v564 = vrot.slane %v562, 1
        %v565 = vsel %vm397, %v560, %v564
        %v567 = vshrl.u32 %v347, 16
        %v569 = vshll.u32 %v347, 16
        %v571 = vrot.slane %v569, 1
        %v572 = vor.u32 %v567, %v571
        %v574 = vshll.u32 %v395, 16
        %v576 = vrot.slane %v574, 1
        %v577 = vsel %vm397, %v572, %v576
        %v579 = vshrl.u32 %v348, 16
        %v581 = vshll.u32 %v348, 16
        %v583 = vrot.slane %v581, 1
        %v584 = vor.u32 %v579, %v583
        %v586 = vshll.u32 %v396, 16
        %v588 = vrot.slane %v586, 1
        %v589 = vsel %vm397, %v584, %v588
        %590 = vrot.lane.b32.xlu0 %v409, 4
        %v591 = vpop.permute.xlu0 %590
        %592 = vrot.lane.b32.xlu0 %v421, 4
        %v593 = vpop.permute.xlu0 %592
        %594 = vrot.lane.b32.xlu0 %v433, 4
        %v595 = vpop.permute.xlu0 %594
        %596 = vrot.lane.b32.xlu0 %v445, 4
        %v597 = vpop.permute.xlu0 %596
        %598 = vrot.lane.b32.xlu0 %v457, 4
        %v599 = vpop.permute.xlu0 %598
        %600 = vrot.lane.b32.xlu0 %v469, 4
        %v601 = vpop.permute.xlu0 %600
        %602 = vrot.lane.b32.xlu0 %v481, 4
        %v603 = vpop.permute.xlu0 %602
        %604 = vrot.lane.b32.xlu0 %v493, 4
        %v605 = vpop.permute.xlu0 %604
        %606 = vrot.lane.b32.xlu0 %v505, 4
        %v607 = vpop.permute.xlu0 %606
        %608 = vrot.lane.b32.xlu0 %v517, 4
        %v609 = vpop.permute.xlu0 %608
        %610 = vrot.lane.b32.xlu0 %v529, 4
        %v611 = vpop.permute.xlu0 %610
        %612 = vrot.lane.b32.xlu0 %v541, 4
        %v613 = vpop.permute.xlu0 %612
        %614 = vrot.lane.b32.xlu0 %v553, 4
        %v615 = vpop.permute.xlu0 %614
        %616 = vrot.lane.b32.xlu0 %v565, 4
        %v617 = vpop.permute.xlu0 %616
        %618 = vrot.lane.b32.xlu0 %v577, 4
        %v619 = vpop.permute.xlu0 %618
        %620 = vrot.lane.b32.xlu0 %v589, 4
        %v621 = vpop.permute.xlu0 %620
        %vm622 = vcmask 1046528
        %v623 = vrot.slane %v333, 1
        %v624 = vrot.slane %v381, 1
        %v625 = vsel %vm622, %v623, %v624
        %v626 = vrot.slane %v334, 1
        %v627 = vrot.slane %v382, 1
        %v628 = vsel %vm622, %v626, %v627
        %v629 = vrot.slane %v335, 1
        %v630 = vrot.slane %v383, 1
        %v631 = vsel %vm622, %v629, %v630
        %v632 = vrot.slane %v336, 1
        %v633 = vrot.slane %v384, 1
        %v634 = vsel %vm622, %v632, %v633
        %v635 = vrot.slane %v337, 1
        %v636 = vrot.slane %v385, 1
        %v637 = vsel %vm622, %v635, %v636
        %v638 = vrot.slane %v338, 1
        %v639 = vrot.slane %v386, 1
        %v640 = vsel %vm622, %v638, %v639
        %v641 = vrot.slane %v339, 1
        %v642 = vrot.slane %v387, 1
        %v643 = vsel %vm622, %v641, %v642
        %v644 = vrot.slane %v340, 1
        %v645 = vrot.slane %v388, 1
        %v646 = vsel %vm622, %v644, %v645
        %v647 = vrot.slane %v341, 1
        %v648 = vrot.slane %v389, 1
        %v649 = vsel %vm622, %v647, %v648
        %v650 = vrot.slane %v342, 1
        %v651 = vrot.slane %v390, 1
        %v652 = vsel %vm622, %v650, %v651
        %v653 = vrot.slane %v343, 1
        %v654 = vrot.slane %v391, 1
        %v655 = vsel %vm622, %v653, %v654
        %v656 = vrot.slane %v344, 1
        %v657 = vrot.slane %v392, 1
        %v658 = vsel %vm622, %v656, %v657
        %v659 = vrot.slane %v345, 1
        %v660 = vrot.slane %v393, 1
        %v661 = vsel %vm622, %v659, %v660
        %v662 = vrot.slane %v346, 1
        %v663 = vrot.slane %v394, 1
        %v664 = vsel %vm622, %v662, %v663
        %v665 = vrot.slane %v347, 1
        %v666 = vrot.slane %v395, 1
        %v667 = vsel %vm622, %v665, %v666
        %v668 = vrot.slane %v348, 1
        %v669 = vrot.slane %v396, 1
        %v670 = vsel %vm622, %v668, %v669
        %671 = vrot.lane.b32.xlu0 %v625, 8
        %v672 = vpop.permute.xlu0 %671
        %673 = vrot.lane.b32.xlu0 %v628, 8
        %v674 = vpop.permute.xlu0 %673
        %675 = vrot.lane.b32.xlu0 %v631, 8
        %v676 = vpop.permute.xlu0 %675
        %677 = vrot.lane.b32.xlu0 %v634, 8
        %v678 = vpop.permute.xlu0 %677
        %679 = vrot.lane.b32.xlu0 %v637, 8
        %v680 = vpop.permute.xlu0 %679
        %681 = vrot.lane.b32.xlu0 %v640, 8
        %v682 = vpop.permute.xlu0 %681
        %683 = vrot.lane.b32.xlu0 %v643, 8
        %v684 = vpop.permute.xlu0 %683
        %685 = vrot.lane.b32.xlu0 %v646, 8
        %v686 = vpop.permute.xlu0 %685
        %687 = vrot.lane.b32.xlu0 %v649, 8
        %v688 = vpop.permute.xlu0 %687
        %689 = vrot.lane.b32.xlu0 %v652, 8
        %v690 = vpop.permute.xlu0 %689
        %691 = vrot.lane.b32.xlu0 %v655, 8
        %v692 = vpop.permute.xlu0 %691
        %693 = vrot.lane.b32.xlu0 %v658, 8
        %v694 = vpop.permute.xlu0 %693
        %695 = vrot.lane.b32.xlu0 %v661, 8
        %v696 = vpop.permute.xlu0 %695
        %697 = vrot.lane.b32.xlu0 %v664, 8
        %v698 = vpop.permute.xlu0 %697
        %699 = vrot.lane.b32.xlu0 %v667, 8
        %v700 = vpop.permute.xlu0 %699
        %701 = vrot.lane.b32.xlu0 %v670, 8
        %v702 = vpop.permute.xlu0 %701
        %v705 = vunpack.c.l.b16 %v263
        %v706 = vunpack.c.l.b16 %v264
        %v707 = vpack.c.b16 %v706, %v705
        %708 = vrot.lane.b32.xlu0 %v334, 12
        %v709 = vpop.permute.xlu0 %708
        %710 = vrot.lane.b32.xlu0 %v335, 12
        %v711 = vpop.permute.xlu0 %710
        %712 = vrot.lane.b32.xlu0 %v336, 12
        %v713 = vpop.permute.xlu0 %712
        %714 = vrot.lane.b32.xlu0 %v337, 12
        %v715 = vpop.permute.xlu0 %714
        %716 = vrot.lane.b32.xlu0 %v338, 12
        %v717 = vpop.permute.xlu0 %716
        %718 = vrot.lane.b32.xlu0 %v339, 12
        %v719 = vpop.permute.xlu0 %718
        %720 = vrot.lane.b32.xlu0 %v340, 12
        %v721 = vpop.permute.xlu0 %720
        %722 = vrot.lane.b32.xlu0 %v341, 12
        %v723 = vpop.permute.xlu0 %722
        %724 = vrot.lane.b32.xlu0 %v342, 12
        %v725 = vpop.permute.xlu0 %724
        %726 = vrot.lane.b32.xlu0 %v343, 12
        %v727 = vpop.permute.xlu0 %726
        %728 = vrot.lane.b32.xlu0 %v344, 12
        %v729 = vpop.permute.xlu0 %728
        %730 = vrot.lane.b32.xlu0 %v345, 12
        %v731 = vpop.permute.xlu0 %730
        %732 = vrot.lane.b32.xlu0 %v346, 12
        %v733 = vpop.permute.xlu0 %732
        %734 = vrot.lane.b32.xlu0 %v347, 12
        %v735 = vpop.permute.xlu0 %734
        %736 = vrot.lane.b32.xlu0 %v348, 12
        %v737 = vpop.permute.xlu0 %736
        %738 = vrot.lane.b32.xlu0 %v707, 12
        %v739 = vpop.permute.xlu0 %738
        %v741 = vunpack.c.l.b16 %v265
        %v742 = vpack.c.b16 %v741, %v741
        %v744 = vshrl.u32 %v707, 16
        %v746 = vshll.u32 %v707, 16
        %v748 = vrot.slane %v746, 1
        %v749 = vor.u32 %v744, %v748
        %v751 = vshll.u32 %v742, 16
        %v753 = vrot.slane %v751, 1
        %v754 = vsel %vm397, %v749, %v753
        %755 = vrot.lane.b32.xlu0 %v421, 16
        %v756 = vpop.permute.xlu0 %755
        %757 = vrot.lane.b32.xlu0 %v433, 16
        %v758 = vpop.permute.xlu0 %757
        %759 = vrot.lane.b32.xlu0 %v445, 16
        %v760 = vpop.permute.xlu0 %759
        %761 = vrot.lane.b32.xlu0 %v457, 16
        %v762 = vpop.permute.xlu0 %761
        %763 = vrot.lane.b32.xlu0 %v469, 16
        %v764 = vpop.permute.xlu0 %763
        %765 = vrot.lane.b32.xlu0 %v481, 16
        %v766 = vpop.permute.xlu0 %765
        %767 = vrot.lane.b32.xlu0 %v493, 16
        %v768 = vpop.permute.xlu0 %767
        %769 = vrot.lane.b32.xlu0 %v505, 16
        %v770 = vpop.permute.xlu0 %769
        %771 = vrot.lane.b32.xlu0 %v517, 16
        %v772 = vpop.permute.xlu0 %771
        %773 = vrot.lane.b32.xlu0 %v529, 16
        %v774 = vpop.permute.xlu0 %773
        %775 = vrot.lane.b32.xlu0 %v541, 16
        %v776 = vpop.permute.xlu0 %775
        %777 = vrot.lane.b32.xlu0 %v553, 16
        %v778 = vpop.permute.xlu0 %777
        %779 = vrot.lane.b32.xlu0 %v565, 16
        %v780 = vpop.permute.xlu0 %779
        %781 = vrot.lane.b32.xlu0 %v577, 16
        %v782 = vpop.permute.xlu0 %781
        %783 = vrot.lane.b32.xlu0 %v589, 16
        %v784 = vpop.permute.xlu0 %783
        %785 = vrot.lane.b32.xlu0 %v754, 16
        %v786 = vpop.permute.xlu0 %785
        %v787 = vrot.slane %v707, 1
        %v788 = vrot.slane %v742, 1
        %v789 = vsel %vm622, %v787, %v788
        %790 = vrot.lane.b32.xlu0 %v628, 20
        %v791 = vpop.permute.xlu0 %790
        %792 = vrot.lane.b32.xlu0 %v631, 20
        %v793 = vpop.permute.xlu0 %792
        %794 = vrot.lane.b32.xlu0 %v634, 20
        %v795 = vpop.permute.xlu0 %794
        %796 = vrot.lane.b32.xlu0 %v637, 20
        %v797 = vpop.permute.xlu0 %796
        %798 = vrot.lane.b32.xlu0 %v640, 20
        %v799 = vpop.permute.xlu0 %798
        %800 = vrot.lane.b32.xlu0 %v643, 20
        %v801 = vpop.permute.xlu0 %800
        %802 = vrot.lane.b32.xlu0 %v646, 20
        %v803 = vpop.permute.xlu0 %802
        %804 = vrot.lane.b32.xlu0 %v649, 20
        %v805 = vpop.permute.xlu0 %804
        %806 = vrot.lane.b32.xlu0 %v652, 20
        %v807 = vpop.permute.xlu0 %806
        %808 = vrot.lane.b32.xlu0 %v655, 20
        %v809 = vpop.permute.xlu0 %808
        %810 = vrot.lane.b32.xlu0 %v658, 20
        %v811 = vpop.permute.xlu0 %810
        %812 = vrot.lane.b32.xlu0 %v661, 20
        %v813 = vpop.permute.xlu0 %812
        %814 = vrot.lane.b32.xlu0 %v664, 20
        %v815 = vpop.permute.xlu0 %814
        %816 = vrot.lane.b32.xlu0 %v667, 20
        %v817 = vpop.permute.xlu0 %816
        %818 = vrot.lane.b32.xlu0 %v670, 20
        %v819 = vpop.permute.xlu0 %818
        %820 = vrot.lane.b32.xlu0 %v789, 20
        %v821 = vpop.permute.xlu0 %820
        %v824 = vunpack.c.l.b16 %v266
        %v825 = vunpack.c.l.b16 %v267
        %v826 = vpack.c.b16 %v825, %v824
        %827 = vrot.lane.b32.xlu0 %v335, 24
        %v828 = vpop.permute.xlu0 %827
        %829 = vrot.lane.b32.xlu0 %v336, 24
        %v830 = vpop.permute.xlu0 %829
        %831 = vrot.lane.b32.xlu0 %v337, 24
        %v832 = vpop.permute.xlu0 %831
        %833 = vrot.lane.b32.xlu0 %v338, 24
        %v834 = vpop.permute.xlu0 %833
        %835 = vrot.lane.b32.xlu0 %v339, 24
        %v836 = vpop.permute.xlu0 %835
        %837 = vrot.lane.b32.xlu0 %v340, 24
        %v838 = vpop.permute.xlu0 %837
        %839 = vrot.lane.b32.xlu0 %v341, 24
        %v840 = vpop.permute.xlu0 %839
        %841 = vrot.lane.b32.xlu0 %v342, 24
        %v842 = vpop.permute.xlu0 %841
        %843 = vrot.lane.b32.xlu0 %v343, 24
        %v844 = vpop.permute.xlu0 %843
        %845 = vrot.lane.b32.xlu0 %v344, 24
        %v846 = vpop.permute.xlu0 %845
        %847 = vrot.lane.b32.xlu0 %v345, 24
        %v848 = vpop.permute.xlu0 %847
        %849 = vrot.lane.b32.xlu0 %v346, 24
        %v850 = vpop.permute.xlu0 %849
        %851 = vrot.lane.b32.xlu0 %v347, 24
        %v852 = vpop.permute.xlu0 %851
        %853 = vrot.lane.b32.xlu0 %v348, 24
        %v854 = vpop.permute.xlu0 %853
        %855 = vrot.lane.b32.xlu0 %v707, 24
        %v856 = vpop.permute.xlu0 %855
        %857 = vrot.lane.b32.xlu0 %v826, 24
        %v858 = vpop.permute.xlu0 %857
        %v860 = vunpack.c.l.b16 %v268
        %v861 = vpack.c.b16 %v860, %v860
        %v863 = vshrl.u32 %v826, 16
        %v865 = vshll.u32 %v826, 16
        %v867 = vrot.slane %v865, 1
        %v868 = vor.u32 %v863, %v867
        %v870 = vshll.u32 %v861, 16
        %v872 = vrot.slane %v870, 1
        %v873 = vsel %vm397, %v868, %v872
        %874 = vrot.lane.b32.xlu0 %v433, 28
        %v875 = vpop.permute.xlu0 %874
        %876 = vrot.lane.b32.xlu0 %v445, 28
        %v877 = vpop.permute.xlu0 %876
        %878 = vrot.lane.b32.xlu0 %v457, 28
        %v879 = vpop.permute.xlu0 %878
        %880 = vrot.lane.b32.xlu0 %v469, 28
        %v881 = vpop.permute.xlu0 %880
        %882 = vrot.lane.b32.xlu0 %v481, 28
        %v883 = vpop.permute.xlu0 %882
        %884 = vrot.lane.b32.xlu0 %v493, 28
        %v885 = vpop.permute.xlu0 %884
        %886 = vrot.lane.b32.xlu0 %v505, 28
        %v887 = vpop.permute.xlu0 %886
        %888 = vrot.lane.b32.xlu0 %v517, 28
        %v889 = vpop.permute.xlu0 %888
        %890 = vrot.lane.b32.xlu0 %v529, 28
        %v891 = vpop.permute.xlu0 %890
        %892 = vrot.lane.b32.xlu0 %v541, 28
        %v893 = vpop.permute.xlu0 %892
        %894 = vrot.lane.b32.xlu0 %v553, 28
        %v895 = vpop.permute.xlu0 %894
        %896 = vrot.lane.b32.xlu0 %v565, 28
        %v897 = vpop.permute.xlu0 %896
        %898 = vrot.lane.b32.xlu0 %v577, 28
        %v899 = vpop.permute.xlu0 %898
        %900 = vrot.lane.b32.xlu0 %v589, 28
        %v901 = vpop.permute.xlu0 %900
        %902 = vrot.lane.b32.xlu0 %v754, 28
        %v903 = vpop.permute.xlu0 %902
        %904 = vrot.lane.b32.xlu0 %v873, 28
        %v905 = vpop.permute.xlu0 %904
        %v906 = vrot.slane %v826, 1
        %v907 = vrot.slane %v861, 1
        %v908 = vsel %vm622, %v906, %v907
        %909 = vrot.lane.b32.xlu0 %v631, 32
        %v910 = vpop.permute.xlu0 %909
        %911 = vrot.lane.b32.xlu0 %v634, 32
        %v912 = vpop.permute.xlu0 %911
        %913 = vrot.lane.b32.xlu0 %v637, 32
        %v914 = vpop.permute.xlu0 %913
        %915 = vrot.lane.b32.xlu0 %v640, 32
        %v916 = vpop.permute.xlu0 %915
        %917 = vrot.lane.b32.xlu0 %v643, 32
        %v918 = vpop.permute.xlu0 %917
        %919 = vrot.lane.b32.xlu0 %v646, 32
        %v920 = vpop.permute.xlu0 %919
        %921 = vrot.lane.b32.xlu0 %v649, 32
        %v922 = vpop.permute.xlu0 %921
        %923 = vrot.lane.b32.xlu0 %v652, 32
        %v924 = vpop.permute.xlu0 %923
        %925 = vrot.lane.b32.xlu0 %v655, 32
        %v926 = vpop.permute.xlu0 %925
        %927 = vrot.lane.b32.xlu0 %v658, 32
        %v928 = vpop.permute.xlu0 %927
        %929 = vrot.lane.b32.xlu0 %v661, 32
        %v930 = vpop.permute.xlu0 %929
        %931 = vrot.lane.b32.xlu0 %v664, 32
        %v932 = vpop.permute.xlu0 %931
        %933 = vrot.lane.b32.xlu0 %v667, 32
        %v934 = vpop.permute.xlu0 %933
        %935 = vrot.lane.b32.xlu0 %v670, 32
        %v936 = vpop.permute.xlu0 %935
        %937 = vrot.lane.b32.xlu0 %v789, 32
        %v938 = vpop.permute.xlu0 %937
        %939 = vrot.lane.b32.xlu0 %v908, 32
        %v940 = vpop.permute.xlu0 %939
        %vm941 = vcmask 31744
        %v943 = vsel %vm941, %v333, %v591
        %v945 = vsel %vm941, %v334, %v593
        %v947 = vsel %vm941, %v335, %v595
        %v949 = vsel %vm941, %v336, %v597
        %v951 = vsel %vm941, %v337, %v599
        %v953 = vsel %vm941, %v338, %v601
        %v955 = vsel %vm941, %v339, %v603
        %v957 = vsel %vm941, %v340, %v605
        %v959 = vsel %vm941, %v341, %v607
        %v961 = vsel %vm941, %v342, %v609
        %v963 = vsel %vm941, %v343, %v611
        %v965 = vsel %vm941, %v344, %v613
        %v967 = vsel %vm941, %v345, %v615
        %v969 = vsel %vm941, %v346, %v617
        %v971 = vsel %vm941, %v347, %v619
        %v973 = vsel %vm941, %v348, %v621
        %vm974 = vcmask 64512
        %v976 = vsel %vm974, %v943, %v672
        %v978 = vsel %vm974, %v945, %v674
        %v980 = vsel %vm974, %v947, %v676
        %v982 = vsel %vm974, %v949, %v678
        %v984 = vsel %vm974, %v951, %v680
        %v986 = vsel %vm974, %v953, %v682
        %v988 = vsel %vm974, %v955, %v684
        %v990 = vsel %vm974, %v957, %v686
        %v992 = vsel %vm974, %v959, %v688
        %v994 = vsel %vm974, %v961, %v690
        %v996 = vsel %vm974, %v963, %v692
        %v998 = vsel %vm974, %v965, %v694
        %v1000 = vsel %vm974, %v967, %v696
        %v1002 = vsel %vm974, %v969, %v698
        %v1004 = vsel %vm974, %v971, %v700
        %v1006 = vsel %vm974, %v973, %v702
        %vm1007 = vcmask 97280
        %v1009 = vsel %vm1007, %v976, %v709
        %v1011 = vsel %vm1007, %v978, %v711
        %v1013 = vsel %vm1007, %v980, %v713
        %v1015 = vsel %vm1007, %v982, %v715
        %v1017 = vsel %vm1007, %v984, %v717
        %v1019 = vsel %vm1007, %v986, %v719
        %v1021 = vsel %vm1007, %v988, %v721
        %v1023 = vsel %vm1007, %v990, %v723
        %v1025 = vsel %vm1007, %v992, %v725
        %v1027 = vsel %vm1007, %v994, %v727
        %v1029 = vsel %vm1007, %v996, %v729
        %v1031 = vsel %vm1007, %v998, %v731
        %v1033 = vsel %vm1007, %v1000, %v733
        %v1035 = vsel %vm1007, %v1002, %v735
        %v1037 = vsel %vm1007, %v1004, %v737
        %v1039 = vsel %vm1007, %v1006, %v739
        %vm1040 = vcmask 130048
        %v1042 = vsel %vm1040, %v1009, %v756
        %v1044 = vsel %vm1040, %v1011, %v758
        %v1046 = vsel %vm1040, %v1013, %v760
        %v1048 = vsel %vm1040, %v1015, %v762
        %v1050 = vsel %vm1040, %v1017, %v764
        %v1052 = vsel %vm1040, %v1019, %v766
        %v1054 = vsel %vm1040, %v1021, %v768
        %v1056 = vsel %vm1040, %v1023, %v770
        %v1058 = vsel %vm1040, %v1025, %v772
        %v1060 = vsel %vm1040, %v1027, %v774
        %v1062 = vsel %vm1040, %v1029, %v776
        %v1064 = vsel %vm1040, %v1031, %v778
        %v1066 = vsel %vm1040, %v1033, %v780
        %v1068 = vsel %vm1040, %v1035, %v782
        %v1070 = vsel %vm1040, %v1037, %v784
        %v1072 = vsel %vm1040, %v1039, %v786
        %vm1073 = vcmask 162816
        %v1075 = vsel %vm1073, %v1042, %v791
        %v1077 = vsel %vm1073, %v1044, %v793
        %v1079 = vsel %vm1073, %v1046, %v795
        %v1081 = vsel %vm1073, %v1048, %v797
        %v1083 = vsel %vm1073, %v1050, %v799
        %v1085 = vsel %vm1073, %v1052, %v801
        %v1087 = vsel %vm1073, %v1054, %v803
        %v1089 = vsel %vm1073, %v1056, %v805
        %v1091 = vsel %vm1073, %v1058, %v807
        %v1093 = vsel %vm1073, %v1060, %v809
        %v1095 = vsel %vm1073, %v1062, %v811
        %v1097 = vsel %vm1073, %v1064, %v813
        %v1099 = vsel %vm1073, %v1066, %v815
        %v1101 = vsel %vm1073, %v1068, %v817
        %v1103 = vsel %vm1073, %v1070, %v819
        %v1105 = vsel %vm1073, %v1072, %v821
        %vm1106 = vcmask 195584
        %v1108 = vsel %vm1106, %v1075, %v828
        %v1110 = vsel %vm1106, %v1077, %v830
        %v1112 = vsel %vm1106, %v1079, %v832
        %v1114 = vsel %vm1106, %v1081, %v834
        %v1116 = vsel %vm1106, %v1083, %v836
        %v1118 = vsel %vm1106, %v1085, %v838
        %v1120 = vsel %vm1106, %v1087, %v840
        %v1122 = vsel %vm1106, %v1089, %v842
        %v1124 = vsel %vm1106, %v1091, %v844
        %v1126 = vsel %vm1106, %v1093, %v846
        %v1128 = vsel %vm1106, %v1095, %v848
        %v1130 = vsel %vm1106, %v1097, %v850
        %v1132 = vsel %vm1106, %v1099, %v852
        %v1134 = vsel %vm1106, %v1101, %v854
        %v1136 = vsel %vm1106, %v1103, %v856
        %v1138 = vsel %vm1106, %v1105, %v858
        %vm1139 = vcmask 228352
        %v1141 = vsel %vm1139, %v1108, %v875
        %v1143 = vsel %vm1139, %v1110, %v877
        %v1145 = vsel %vm1139, %v1112, %v879
        %v1147 = vsel %vm1139, %v1114, %v881
        %v1149 = vsel %vm1139, %v1116, %v883
        %v1151 = vsel %vm1139, %v1118, %v885
        %v1153 = vsel %vm1139, %v1120, %v887
        %v1155 = vsel %vm1139, %v1122, %v889
        %v1157 = vsel %vm1139, %v1124, %v891
        %v1159 = vsel %vm1139, %v1126, %v893
        %v1161 = vsel %vm1139, %v1128, %v895
        %v1163 = vsel %vm1139, %v1130, %v897
        %v1165 = vsel %vm1139, %v1132, %v899
        %v1167 = vsel %vm1139, %v1134, %v901
        %v1169 = vsel %vm1139, %v1136, %v903
        %v1171 = vsel %vm1139, %v1138, %v905
        %vm1172 = vcmask 261120
        %v1174 = vsel %vm1172, %v1141, %v910
        %v1176 = vsel %vm1172, %v1143, %v912
        %v1178 = vsel %vm1172, %v1145, %v914
        %v1180 = vsel %vm1172, %v1147, %v916
        %v1182 = vsel %vm1172, %v1149, %v918
        %v1184 = vsel %vm1172, %v1151, %v920
        %v1186 = vsel %vm1172, %v1153, %v922
        %v1188 = vsel %vm1172, %v1155, %v924
        %v1190 = vsel %vm1172, %v1157, %v926
        %v1192 = vsel %vm1172, %v1159, %v928
        %v1194 = vsel %vm1172, %v1161, %v930
        %v1196 = vsel %vm1172, %v1163, %v932
        %v1198 = vsel %vm1172, %v1165, %v934
        %v1200 = vsel %vm1172, %v1167, %v936
        %v1202 = vsel %vm1172, %v1169, %v938
        %v1204 = vsel %vm1172, %v1171, %v940
        %v1205 = vld [vmem:[%s210] sm:$0xf]
        %v1206 = vld [vmem:[%s210 + $0x4] sm:$0xf]
        %v1207 = vld [vmem:[%s210 + $0x8] sm:$0xf]
        %v1208 = vld [vmem:[%s210 + $0xc] sm:$0xf]
        %v1209 = vld [vmem:[%s210 + $0x10] sm:$0x3]
        %v1210 = vld [vmem:[%s213] sm:$0x1]
        %v1212 = vlaneseq
        %v1213 = vshrl.u32 %v1212, 7
        %v1214 = vsub.s32 0, %v1213
        %v1215 = vrot.slane %v1210, %v1214
        %v1222 = vunpack.c.l.b16 %v1205
        %v1223 = vunpack.c.l.b16 %v1206
        %v1224 = vunpack.c.l.b16 %v1207
        %v1225 = vunpack.c.l.b16 %v1208
        %v1226 = vunpack.c.l.b16 %v1209
        %v1227 = vpack.c.b16 %v1223, %v1222
        %v1228 = vpack.c.b16 %v1225, %v1224
        %v1229 = vpack.c.b16 %v1226, %v1226
        %vm1232 = vcmask 293888
        %v1233 = vsel %vm1232, %v1174, 0
        %v1235 = vsel %vm1232, %v1176, 0
        %v1237 = vsel %vm1232, %v1178, 0
        %v1239 = vsel %vm1232, %v1180, 0
        %v1241 = vsel %vm1232, %v1182, 0
        %v1243 = vsel %vm1232, %v1184, 0
        %v1245 = vsel %vm1232, %v1186, 0
        %v1247 = vsel %vm1232, %v1188, 0
        %v1249 = vsel %vm1232, %v1190, 0
        %v1251 = vsel %vm1232, %v1192, 0
        %v1253 = vsel %vm1232, %v1194, 0
        %v1255 = vsel %vm1232, %v1196, 0
        %v1257 = vsel %vm1232, %v1198, 0
        %v1259 = vsel %vm1232, %v1200, 0
        %v1261 = vsel %vm1232, %v1202, 0
        %v1263 = vsel %vm1232, %v1204, 0
        %vm1265 = vcmask 1041408
        %v1267 = vsel %vm1265, %v1229, 0
        %1269 = vmatprep.subr.bf16.mxu0 0
        %1270 = vmatpush1.bf16.msra.mxu0 0
        %1271 = vmatprep.subr.bf16.mxu0 0
        %1272 = vmatpush1.bf16.msra.mxu0 0
        %1273 = vmatprep.subr.bf16.mxu0 0
        %1274 = vmatpush1.bf16.msra.mxu0 0
        %1275 = vmatprep.subr.bf16.mxu0 0
        %1276 = vmatpush1.bf16.msra.mxu0 0
        %1277 = vmatprep.subr.bf16.mxu0 0
        %1278 = vmatpush1.bf16.msra.mxu0 0
        %1279 = vmatprep.subr.bf16.mxu0 0
        %1280 = vmatpush1.bf16.msra.mxu0 %v1267
        %1281 = vmatprep.subr.bf16.mxu0 0
        %1282 = vmatpush1.bf16.msra.mxu0 %v1228
        %1283 = vmatprep.subr.bf16.mxu0 0
        %1284 = vmatpush1.bf16.msra.mxu0 %v1227
        %1285 = vmatprep.subr.bf16.mxu0 0
        %1286 = vmatpush2.bf16.msra.mxu0 0
        %1287 = vmatprep.subr.bf16.mxu0 0
        %1288 = vmatpush2.bf16.msra.mxu0 0
        %1289 = vmatprep.subr.bf16.mxu0 0
        %1290 = vmatpush2.bf16.msra.mxu0 0
        %1291 = vmatprep.subr.bf16.mxu0 0
        %1292 = vmatpush2.bf16.msra.mxu0 0
        %1293 = vmatprep.subr.bf16.mxu0 0
        %1294 = vmatpush2.bf16.msra.mxu0 0
        %1295 = vmatprep.subr.bf16.mxu0 0
        %1296 = vmatpush2.bf16.msra.mxu0 0
        %1297 = vmatprep.subr.bf16.mxu0 0
        %1298 = vmatpush2.bf16.msra.mxu0 0
        %1299 = vmatprep.subr.bf16.mxu0 0
        %1300 = vmatpush2.bf16.msra.mxu0 0
        %1301 = vmatprep.mubr.bf16.mxu0 0
        %1302 = vmatmul.mubr.bf16.gmra.mxu0 %v1233
        %v1303 = vpop.f32.mrf.mxu0
        %v1304 = vadd.f32 %v1215, %v1303
        %v1305 = vpop.f32.mrf.mxu0
        %v1306 = vpop.f32.mrf.mxu0
        %v1307 = vadd.f32 %v1215, %v1306
        %v1308 = vpop.f32.mrf.mxu0
        %1309 = vmatprep.mubr.bf16.mxu0 0
        %1310 = vmatmul.mubr.bf16.gmra.mxu0 %v1235
        %v1311 = vpop.f32.mrf.mxu0
        %v1312 = vadd.f32 %v1215, %v1311
        %v1313 = vpop.f32.mrf.mxu0
        %v1314 = vpop.f32.mrf.mxu0
        %v1315 = vadd.f32 %v1215, %v1314
        %v1316 = vpop.f32.mrf.mxu0
        %1317 = vmatprep.mubr.bf16.mxu0 0
        %1318 = vmatmul.mubr.bf16.gmra.mxu0 %v1237
        %v1319 = vpop.f32.mrf.mxu0
        %v1320 = vadd.f32 %v1215, %v1319
        %v1321 = vpop.f32.mrf.mxu0
        %v1322 = vpop.f32.mrf.mxu0
        %v1323 = vadd.f32 %v1215, %v1322
        %v1324 = vpop.f32.mrf.mxu0
        %1325 = vmatprep.mubr.bf16.mxu0 0
        %1326 = vmatmul.mubr.bf16.gmra.mxu0 %v1239
        %v1327 = vpop.f32.mrf.mxu0
        %v1328 = vadd.f32 %v1215, %v1327
        %v1329 = vpop.f32.mrf.mxu0
        %v1330 = vpop.f32.mrf.mxu0
        %v1331 = vadd.f32 %v1215, %v1330
        %v1332 = vpop.f32.mrf.mxu0
        %1333 = vmatprep.mubr.bf16.mxu0 0
        %1334 = vmatmul.mubr.bf16.gmra.mxu0 %v1241
        %v1335 = vpop.f32.mrf.mxu0
        %v1336 = vadd.f32 %v1215, %v1335
        %v1337 = vpop.f32.mrf.mxu0
        %v1338 = vpop.f32.mrf.mxu0
        %v1339 = vadd.f32 %v1215, %v1338
        %v1340 = vpop.f32.mrf.mxu0
        %1341 = vmatprep.mubr.bf16.mxu0 0
        %1342 = vmatmul.mubr.bf16.gmra.mxu0 %v1243
        %v1343 = vpop.f32.mrf.mxu0
        %v1344 = vadd.f32 %v1215, %v1343
        %v1345 = vpop.f32.mrf.mxu0
        %v1346 = vpop.f32.mrf.mxu0
        %v1347 = vadd.f32 %v1215, %v1346
        %v1348 = vpop.f32.mrf.mxu0
        %1349 = vmatprep.mubr.bf16.mxu0 0
        %1350 = vmatmul.mubr.bf16.gmra.mxu0 %v1245
        %v1351 = vpop.f32.mrf.mxu0
        %v1352 = vadd.f32 %v1215, %v1351
        %v1353 = vpop.f32.mrf.mxu0
        %v1354 = vpop.f32.mrf.mxu0
        %v1355 = vadd.f32 %v1215, %v1354
        %v1356 = vpop.f32.mrf.mxu0
        %1357 = vmatprep.mubr.bf16.mxu0 0
        %1358 = vmatmul.mubr.bf16.gmra.mxu0 %v1247
        %v1359 = vpop.f32.mrf.mxu0
        %v1360 = vadd.f32 %v1215, %v1359
        %v1361 = vpop.f32.mrf.mxu0
        %v1362 = vpop.f32.mrf.mxu0
        %v1363 = vadd.f32 %v1215, %v1362
        %v1364 = vpop.f32.mrf.mxu0
        %1365 = vmatprep.mubr.bf16.mxu0 0
        %1366 = vmatmul.mubr.bf16.gmra.mxu0 %v1249
        %v1367 = vpop.f32.mrf.mxu0
        %v1368 = vadd.f32 %v1215, %v1367
        %v1369 = vpop.f32.mrf.mxu0
        %v1370 = vpop.f32.mrf.mxu0
        %v1371 = vadd.f32 %v1215, %v1370
        %v1372 = vpop.f32.mrf.mxu0
        %1373 = vmatprep.mubr.bf16.mxu0 0
        %1374 = vmatmul.mubr.bf16.gmra.mxu0 %v1251
        %v1375 = vpop.f32.mrf.mxu0
        %v1376 = vadd.f32 %v1215, %v1375
        %v1377 = vpop.f32.mrf.mxu0
        %v1378 = vpop.f32.mrf.mxu0
        %v1379 = vadd.f32 %v1215, %v1378
        %v1380 = vpop.f32.mrf.mxu0
        %1381 = vmatprep.mubr.bf16.mxu0 0
        %1382 = vmatmul.mubr.bf16.gmra.mxu0 %v1253
        %v1383 = vpop.f32.mrf.mxu0
        %v1384 = vadd.f32 %v1215, %v1383
        %v1385 = vpop.f32.mrf.mxu0
        %v1386 = vpop.f32.mrf.mxu0
        %v1387 = vadd.f32 %v1215, %v1386
        %v1388 = vpop.f32.mrf.mxu0
        %1389 = vmatprep.mubr.bf16.mxu0 0
        %1390 = vmatmul.mubr.bf16.gmra.mxu0 %v1255
        %v1391 = vpop.f32.mrf.mxu0
        %v1392 = vadd.f32 %v1215, %v1391
        %v1393 = vpop.f32.mrf.mxu0
        %v1394 = vpop.f32.mrf.mxu0
        %v1395 = vadd.f32 %v1215, %v1394
        %v1396 = vpop.f32.mrf.mxu0
        %1397 = vmatprep.mubr.bf16.mxu0 0
        %1398 = vmatmul.mubr.bf16.gmra.mxu0 %v1257
        %v1399 = vpop.f32.mrf.mxu0
        %v1400 = vadd.f32 %v1215, %v1399
        %v1401 = vpop.f32.mrf.mxu0
        %v1402 = vpop.f32.mrf.mxu0
        %v1403 = vadd.f32 %v1215, %v1402
        %v1404 = vpop.f32.mrf.mxu0
        %1405 = vmatprep.mubr.bf16.mxu0 0
        %1406 = vmatmul.mubr.bf16.gmra.mxu0 %v1259
        %v1407 = vpop.f32.mrf.mxu0
        %v1408 = vadd.f32 %v1215, %v1407
        %v1409 = vpop.f32.mrf.mxu0
        %v1410 = vpop.f32.mrf.mxu0
        %v1411 = vadd.f32 %v1215, %v1410
        %v1412 = vpop.f32.mrf.mxu0
        %1413 = vmatprep.mubr.bf16.mxu0 0
        %1414 = vmatmul.mubr.bf16.gmra.mxu0 %v1261
        %v1415 = vpop.f32.mrf.mxu0
        %v1416 = vadd.f32 %v1215, %v1415
        %v1417 = vpop.f32.mrf.mxu0
        %v1418 = vpop.f32.mrf.mxu0
        %v1419 = vadd.f32 %v1215, %v1418
        %v1420 = vpop.f32.mrf.mxu0
        %1421 = vmatprep.mubr.bf16.mxu0 0
        %1422 = vmatmul.mubr.bf16.gmra.mxu0 %v1263
        %v1423 = vpop.f32.mrf.mxu0
        %v1424 = vadd.f32 %v1215, %v1423
        %v1425 = vpop.f32.mrf.mxu0
        %v1426 = vpop.f32.mrf.mxu0
        %v1427 = vadd.f32 %v1215, %v1426
        %v1428 = vpop.f32.mrf.mxu0
        %1429 = vdwg.mxu0
        %v1430 = vsub.f32 0.0, %v1304
        %v1431 = vsub.f32 0.0, %v1307
        %v1432 = vsub.f32 0.0, %v1312
        %v1433 = vsub.f32 0.0, %v1315
        %v1434 = vsub.f32 0.0, %v1320
        %v1435 = vsub.f32 0.0, %v1323
        %v1436 = vsub.f32 0.0, %v1328
        %v1437 = vsub.f32 0.0, %v1331
        %v1438 = vsub.f32 0.0, %v1336
        %v1439 = vsub.f32 0.0, %v1339
        %v1440 = vsub.f32 0.0, %v1344
        %v1441 = vsub.f32 0.0, %v1347
        %v1442 = vsub.f32 0.0, %v1352
        %v1443 = vsub.f32 0.0, %v1355
        %v1444 = vsub.f32 0.0, %v1360
        %v1445 = vsub.f32 0.0, %v1363
        %v1446 = vsub.f32 0.0, %v1368
        %v1447 = vsub.f32 0.0, %v1371
        %v1448 = vsub.f32 0.0, %v1376
        %v1449 = vsub.f32 0.0, %v1379
        %v1450 = vsub.f32 0.0, %v1384
        %v1451 = vsub.f32 0.0, %v1387
        %v1452 = vsub.f32 0.0, %v1392
        %v1453 = vsub.f32 0.0, %v1395
        %v1454 = vsub.f32 0.0, %v1400
        %v1455 = vsub.f32 0.0, %v1403
        %v1456 = vsub.f32 0.0, %v1408
        %v1457 = vsub.f32 0.0, %v1411
        %v1458 = vsub.f32 0.0, %v1416
        %v1459 = vsub.f32 0.0, %v1419
        %v1460 = vsub.f32 0.0, %v1424
        %v1461 = vsub.f32 0.0, %v1427
        %v1462 = vmul.f32 %v1430, 1.442695
        %v1463 = vpow.pop %v1462
        %v1464 = vmul.f32 %v1431, 1.442695
        %v1465 = vpow.pop %v1464
        %v1466 = vmul.f32 %v1432, 1.442695
        %v1467 = vpow.pop %v1466
        %v1468 = vmul.f32 %v1433, 1.442695
        %v1469 = vpow.pop %v1468
        %v1470 = vmul.f32 %v1434, 1.442695
        %v1471 = vpow.pop %v1470
        %v1472 = vmul.f32 %v1435, 1.442695
        %v1473 = vpow.pop %v1472
        %v1474 = vmul.f32 %v1436, 1.442695
        %v1475 = vpow.pop %v1474
        %v1476 = vmul.f32 %v1437, 1.442695
        %v1477 = vpow.pop %v1476
        %v1478 = vmul.f32 %v1438, 1.442695
        %v1479 = vpow.pop %v1478
        %v1480 = vmul.f32 %v1439, 1.442695
        %v1481 = vpow.pop %v1480
        %v1482 = vmul.f32 %v1440, 1.442695
        %v1483 = vpow.pop %v1482
        %v1484 = vmul.f32 %v1441, 1.442695
        %v1485 = vpow.pop %v1484
        %v1486 = vmul.f32 %v1442, 1.442695
        %v1487 = vpow.pop %v1486
        %v1488 = vmul.f32 %v1443, 1.442695
        %v1489 = vpow.pop %v1488
        %v1490 = vmul.f32 %v1444, 1.442695
        %v1491 = vpow.pop %v1490
        %v1492 = vmul.f32 %v1445, 1.442695
        %v1493 = vpow.pop %v1492
        %v1494 = vmul.f32 %v1446, 1.442695
        %v1495 = vpow.pop %v1494
        %v1496 = vmul.f32 %v1447, 1.442695
        %v1497 = vpow.pop %v1496
        %v1498 = vmul.f32 %v1448, 1.442695
        %v1499 = vpow.pop %v1498
        %v1500 = vmul.f32 %v1449, 1.442695
        %v1501 = vpow.pop %v1500
        %v1502 = vmul.f32 %v1450, 1.442695
        %v1503 = vpow.pop %v1502
        %v1504 = vmul.f32 %v1451, 1.442695
        %v1505 = vpow.pop %v1504
        %v1506 = vmul.f32 %v1452, 1.442695
        %v1507 = vpow.pop %v1506
        %v1508 = vmul.f32 %v1453, 1.442695
        %v1509 = vpow.pop %v1508
        %v1510 = vmul.f32 %v1454, 1.442695
        %v1511 = vpow.pop %v1510
        %v1512 = vmul.f32 %v1455, 1.442695
        %v1513 = vpow.pop %v1512
        %v1514 = vmul.f32 %v1456, 1.442695
        %v1515 = vpow.pop %v1514
        %v1516 = vmul.f32 %v1457, 1.442695
        %v1517 = vpow.pop %v1516
        %v1518 = vmul.f32 %v1458, 1.442695
        %v1519 = vpow.pop %v1518
        %v1520 = vmul.f32 %v1459, 1.442695
        %v1521 = vpow.pop %v1520
        %v1522 = vmul.f32 %v1460, 1.442695
        %v1523 = vpow.pop %v1522
        %v1524 = vmul.f32 %v1461, 1.442695
        %v1525 = vpow.pop %v1524
        %v1526 = vadd.f32 %v1463, 1.0
        %v1527 = vadd.f32 %v1465, 1.0
        %v1528 = vadd.f32 %v1467, 1.0
        %v1529 = vadd.f32 %v1469, 1.0
        %v1530 = vadd.f32 %v1471, 1.0
        %v1531 = vadd.f32 %v1473, 1.0
        %v1532 = vadd.f32 %v1475, 1.0
        %v1533 = vadd.f32 %v1477, 1.0
        %v1534 = vadd.f32 %v1479, 1.0
        %v1535 = vadd.f32 %v1481, 1.0
        %v1536 = vadd.f32 %v1483, 1.0
        %v1537 = vadd.f32 %v1485, 1.0
        %v1538 = vadd.f32 %v1487, 1.0
        %v1539 = vadd.f32 %v1489, 1.0
        %v1540 = vadd.f32 %v1491, 1.0
        %v1541 = vadd.f32 %v1493, 1.0
        %v1542 = vadd.f32 %v1495, 1.0
        %v1543 = vadd.f32 %v1497, 1.0
        %v1544 = vadd.f32 %v1499, 1.0
        %v1545 = vadd.f32 %v1501, 1.0
        %v1546 = vadd.f32 %v1503, 1.0
        %v1547 = vadd.f32 %v1505, 1.0
        %v1548 = vadd.f32 %v1507, 1.0
        %v1549 = vadd.f32 %v1509, 1.0
        %v1550 = vadd.f32 %v1511, 1.0
        %v1551 = vadd.f32 %v1513, 1.0
        %v1552 = vadd.f32 %v1515, 1.0
        %v1553 = vadd.f32 %v1517, 1.0
        %v1554 = vadd.f32 %v1519, 1.0
        %v1555 = vadd.f32 %v1521, 1.0
        %v1556 = vadd.f32 %v1523, 1.0
        %v1557 = vadd.f32 %v1525, 1.0
        %v1558 = vrcp.pop %v1526
        %v1559 = vrcp.pop %v1527
        %v1560 = vrcp.pop %v1528
        %v1561 = vrcp.pop %v1529
        %v1562 = vrcp.pop %v1530
        %v1563 = vrcp.pop %v1531
        %v1564 = vrcp.pop %v1532
        %v1565 = vrcp.pop %v1533
        %v1566 = vrcp.pop %v1534
        %v1567 = vrcp.pop %v1535
        %v1568 = vrcp.pop %v1536
        %v1569 = vrcp.pop %v1537
        %v1570 = vrcp.pop %v1538
        %v1571 = vrcp.pop %v1539
        %v1572 = vrcp.pop %v1540
        %v1573 = vrcp.pop %v1541
        %v1574 = vrcp.pop %v1542
        %v1575 = vrcp.pop %v1543
        %v1576 = vrcp.pop %v1544
        %v1577 = vrcp.pop %v1545
        %v1578 = vrcp.pop %v1546
        %v1579 = vrcp.pop %v1547
        %v1580 = vrcp.pop %v1548
        %v1581 = vrcp.pop %v1549
        %v1582 = vrcp.pop %v1550
        %v1583 = vrcp.pop %v1551
        %v1584 = vrcp.pop %v1552
        %v1585 = vrcp.pop %v1553
        %v1586 = vrcp.pop %v1554
        %v1587 = vrcp.pop %v1555
        %v1588 = vrcp.pop %v1556
        %v1589 = vrcp.pop %v1557
        %v1590 = vmul.f32 %v1304, %v1558
        %v1591 = vmul.f32 %v1307, %v1559
        %v1592 = vmul.f32 %v1312, %v1560
        %v1593 = vmul.f32 %v1315, %v1561
        %v1594 = vmul.f32 %v1320, %v1562
        %v1595 = vmul.f32 %v1323, %v1563
        %v1596 = vmul.f32 %v1328, %v1564
        %v1597 = vmul.f32 %v1331, %v1565
        %v1598 = vmul.f32 %v1336, %v1566
        %v1599 = vmul.f32 %v1339, %v1567
        %v1600 = vmul.f32 %v1344, %v1568
        %v1601 = vmul.f32 %v1347, %v1569
        %v1602 = vmul.f32 %v1352, %v1570
        %v1603 = vmul.f32 %v1355, %v1571
        %v1604 = vmul.f32 %v1360, %v1572
        %v1605 = vmul.f32 %v1363, %v1573
        %v1606 = vmul.f32 %v1368, %v1574
        %v1607 = vmul.f32 %v1371, %v1575
        %v1608 = vmul.f32 %v1376, %v1576
        %v1609 = vmul.f32 %v1379, %v1577
        %v1610 = vmul.f32 %v1384, %v1578
        %v1611 = vmul.f32 %v1387, %v1579
        %v1612 = vmul.f32 %v1392, %v1580
        %v1613 = vmul.f32 %v1395, %v1581
        %v1614 = vmul.f32 %v1400, %v1582
        %v1615 = vmul.f32 %v1403, %v1583
        %v1616 = vmul.f32 %v1408, %v1584
        %v1617 = vmul.f32 %v1411, %v1585
        %v1618 = vmul.f32 %v1416, %v1586
        %v1619 = vmul.f32 %v1419, %v1587
        %v1620 = vmul.f32 %v1424, %v1588
        %v1621 = vmul.f32 %v1427, %v1589
        %v1622 = vpack.c.bf16 %v1591, %v1590
        %v1623 = vpack.c.bf16 %v1593, %v1592
        %v1624 = vpack.c.bf16 %v1595, %v1594
        %v1625 = vpack.c.bf16 %v1597, %v1596
        %v1626 = vpack.c.bf16 %v1599, %v1598
        %v1627 = vpack.c.bf16 %v1601, %v1600
        %v1628 = vpack.c.bf16 %v1603, %v1602
        %v1629 = vpack.c.bf16 %v1605, %v1604
        %v1630 = vpack.c.bf16 %v1607, %v1606
        %v1631 = vpack.c.bf16 %v1609, %v1608
        %v1632 = vpack.c.bf16 %v1611, %v1610
        %v1633 = vpack.c.bf16 %v1613, %v1612
        %v1634 = vpack.c.bf16 %v1615, %v1614
        %v1635 = vpack.c.bf16 %v1617, %v1616
        %v1636 = vpack.c.bf16 %v1619, %v1618
        %v1637 = vpack.c.bf16 %v1621, %v1620
        %v1654 = vunpack.c.l.b16 %v1622
        %v1655 = vunpack.c.h.b16 %v1622
        %v1656 = vunpack.c.l.b16 %v1623
        %v1657 = vunpack.c.h.b16 %v1623
        %v1658 = vunpack.c.l.b16 %v1624
        %v1659 = vunpack.c.h.b16 %v1624
        %v1660 = vunpack.c.l.b16 %v1625
        %v1661 = vunpack.c.h.b16 %v1625
        %v1662 = vunpack.c.l.b16 %v1626
        %v1663 = vunpack.c.h.b16 %v1626
        %v1664 = vunpack.c.l.b16 %v1627
        %v1665 = vunpack.c.h.b16 %v1627
        %v1666 = vunpack.c.l.b16 %v1628
        %v1667 = vunpack.c.h.b16 %v1628
        %v1668 = vunpack.c.l.b16 %v1629
        %v1669 = vunpack.c.h.b16 %v1629
        %v1670 = vunpack.c.l.b16 %v1630
        %v1671 = vunpack.c.h.b16 %v1630
        %v1672 = vunpack.c.l.b16 %v1631
        %v1673 = vunpack.c.h.b16 %v1631
        %v1674 = vunpack.c.l.b16 %v1632
        %v1675 = vunpack.c.h.b16 %v1632
        %v1676 = vunpack.c.l.b16 %v1633
        %v1677 = vunpack.c.h.b16 %v1633
        %v1678 = vunpack.c.l.b16 %v1634
        %v1679 = vunpack.c.h.b16 %v1634
        %v1680 = vunpack.c.l.b16 %v1635
        %v1681 = vunpack.c.h.b16 %v1635
        %v1682 = vunpack.c.l.b16 %v1636
        %v1683 = vunpack.c.h.b16 %v1636
        %v1684 = vunpack.c.l.b16 %v1637
        %v1685 = vunpack.c.h.b16 %v1637
        %v1686 = vpack.c.b16 %v1654, %v1654
        %v1687 = vpack.c.b16 %v1655, %v1655
        %v1688 = vpack.c.b16 %v1656, %v1656
        %v1689 = vpack.c.b16 %v1657, %v1657
        %v1690 = vpack.c.b16 %v1658, %v1658
        %v1691 = vpack.c.b16 %v1659, %v1659
        %v1692 = vpack.c.b16 %v1660, %v1660
        %v1693 = vpack.c.b16 %v1661, %v1661
        %v1694 = vpack.c.b16 %v1662, %v1662
        %v1695 = vpack.c.b16 %v1663, %v1663
        %v1696 = vpack.c.b16 %v1664, %v1664
        %v1697 = vpack.c.b16 %v1665, %v1665
        %v1698 = vpack.c.b16 %v1666, %v1666
        %v1699 = vpack.c.b16 %v1667, %v1667
        %v1700 = vpack.c.b16 %v1668, %v1668
        %v1701 = vpack.c.b16 %v1669, %v1669
        %v1702 = vpack.c.b16 %v1670, %v1670
        %v1703 = vpack.c.b16 %v1671, %v1671
        %v1704 = vpack.c.b16 %v1672, %v1672
        %v1705 = vpack.c.b16 %v1673, %v1673
        %v1706 = vpack.c.b16 %v1674, %v1674
        %v1707 = vpack.c.b16 %v1675, %v1675
        %v1708 = vpack.c.b16 %v1676, %v1676
        %v1709 = vpack.c.b16 %v1677, %v1677
        %v1710 = vpack.c.b16 %v1678, %v1678
        %v1711 = vpack.c.b16 %v1679, %v1679
        %v1712 = vpack.c.b16 %v1680, %v1680
        %v1713 = vpack.c.b16 %v1681, %v1681
        %v1714 = vpack.c.b16 %v1682, %v1682
        %v1715 = vpack.c.b16 %v1683, %v1683
        %v1716 = vpack.c.b16 %v1684, %v1684
        %v1717 = vpack.c.b16 %v1685, %v1685
        %1750 = vst [vmem:[%s201] sm:$0xf] %v1686
        %1751 = vst [vmem:[%s201 + $0x4] sm:$0xf] %v1687
        %1752 = vst [vmem:[%s201 + $0x8] sm:$0xf] %v1688
        %1753 = vst [vmem:[%s201 + $0xc] sm:$0xf] %v1689
        %1754 = vst [vmem:[%s201 + $0x10] sm:$0xf] %v1690
        %1755 = vst [vmem:[%s201 + $0x14] sm:$0xf] %v1691
        %1756 = vst [vmem:[%s201 + $0x18] sm:$0xf] %v1692
        %1757 = vst [vmem:[%s201 + $0x1c] sm:$0xf] %v1693
        %1758 = vst [vmem:[%s201 + $0x20] sm:$0xf] %v1694
        %1759 = vst [vmem:[%s201 + $0x24] sm:$0xf] %v1695
        %1760 = vst [vmem:[%s201 + $0x28] sm:$0xf] %v1696
        %1761 = vst [vmem:[%s201 + $0x2c] sm:$0xf] %v1697
        %1762 = vst [vmem:[%s201 + $0x30] sm:$0xf] %v1698
        %1763 = vst [vmem:[%s201 + $0x34] sm:$0xf] %v1699
        %1764 = vst [vmem:[%s201 + $0x38] sm:$0xf] %v1700
        %1765 = vst [vmem:[%s201 + $0x3c] sm:$0xf] %v1701
        %1766 = vst [vmem:[%s201 + $0x40] sm:$0xf] %v1702
        %1767 = vst [vmem:[%s201 + $0x44] sm:$0xf] %v1703
        %1768 = vst [vmem:[%s201 + $0x48] sm:$0xf] %v1704
        %1769 = vst [vmem:[%s201 + $0x4c] sm:$0xf] %v1705
        %1770 = vst [vmem:[%s201 + $0x50] sm:$0xf] %v1706
        %1771 = vst [vmem:[%s201 + $0x54] sm:$0xf] %v1707
        %1772 = vst [vmem:[%s201 + $0x58] sm:$0xf] %v1708
        %1773 = vst [vmem:[%s201 + $0x5c] sm:$0xf] %v1709
        %1774 = vst [vmem:[%s201 + $0x60] sm:$0xf] %v1710
        %1775 = vst [vmem:[%s201 + $0x64] sm:$0xf] %v1711
        %1776 = vst [vmem:[%s201 + $0x68] sm:$0xf] %v1712
        %1777 = vst [vmem:[%s201 + $0x6c] sm:$0xf] %v1713
        %1778 = vst [vmem:[%s201 + $0x70] sm:$0xf] %v1714
        %1779 = vst [vmem:[%s201 + $0x74] sm:$0xf] %v1715
        %1780 = vst [vmem:[%s201 + $0x78] sm:$0xf] %v1716
        %1781 = vst [vmem:[%s201 + $0x7c] sm:$0xf] %v1717
        %s1782 = sand.u32 %s117, 1
        %s1783 = scalar_lea.sflag [#allocation3], %s1782
        %s1784 = sand.u32 %s117, 1
        %s1785 = smul.addr %s1784, 128
        %s1786 = scalar_lea.vmem [#allocation2], %s1785
        // Predicated region
        $region33: #{tpu_custom_call.1} parent=31 // pred_check
          %p1787 = pneg %p127
        $region34: #{tpu_custom_call.1} parent=31 // pred_check_branch
          %1789 = sbr.rel (%p1787) target = $region36
        $region35: #{tpu_custom_call.1} parent=31 // pred_region
          %s1791 = ssub.s32 2048, 2048
          %1792 = vsyncadd %s1783, %s1791
          %s1793 = smul.addr %s22, 32
          %s1794 = sadd.s32 %s21, %s1793
          %s1795 = smul.addr %s1794, 64
          %s1796 = scalar_lea.hbm %s3, %s1795
          %s1797 = sshll.u32 %s1786, 4
          %s1798 = int_to_ptr.vmem [resolvable:$true] %s1797
          %1803 = dma.vmem_to_hbm [thread:$0]  %s1798, 2048, %s1796, %s1783, 64, 64, 4
        $region36: #{tpu_custom_call.1} parent=31 // pred_fallthru
          _
      $region32: #{tpu_custom_call.1} parent=5 // pred_fallthru
        _
      %p1804 = scmp.le.s32.totalorder 2, %s12
      // Predicated region
      $region37: #{tpu_custom_call.1} parent=5 // pred_check
        %p1805 = pneg %p1804
      $region38: #{tpu_custom_call.1} parent=5 // pred_check_branch
        %1807 = sbr.rel (%p1805) target = $region40
      $region39: #{tpu_custom_call.1} parent=5 // pred_region
        %s1808 = ssub.s32 %s12, 2
        // Predicated region
        $region41: #{tpu_custom_call.1} parent=39 // pred_check
          %p1809 = pneg %p133
        $region42: #{tpu_custom_call.1} parent=39 // pred_check_branch
          %1811 = sbr.rel (%p1809) target = $region44
        $region43: #{tpu_custom_call.1} parent=39 // pred_region
          %s1812 = sand.u32 %s118, 1
          %s1813 = scalar_lea.sflag [#allocation3], %s1812
          %s1814 = sand.u32 %s118, 1
          %s1815 = smul.addr %s1814, 128
          %s1816 = scalar_lea.vmem [#allocation2], %s1815
          %1817 = dma.done %s1813, 2048
        $region44: #{tpu_custom_call.1} parent=39 // pred_fallthru
          _
      $region40: #{tpu_custom_call.1} parent=5 // pred_fallthru
        _
    $region6: #{tpu_custom_call.1} parent=1 // loop_footer
      %s16 = sadd.s32 1, %s12
    $region7: #{tpu_custom_call.1} parent=1 // loop_footer_branch
      %11 = sbr.rel target = $region3
    $region8: #{tpu_custom_call.1} parent=1 // loop_exit
      _
    %1818 = vsyncpa [#allocation3], 1
    %s1819 = scalar_lea.sflag [#allocation3], 1
    %1820 = vsyncpa %s1819, 1

</llo_original>
